<compile_context>
chip_gen: v6e
topology: v6e:2x2x1
jax: 0.10.0
libtpu: 0.0.40
codegen_flags: <defaults>
</compile_context>

<pallas_src>
import functools

import numpy as np
import jax
import jax.numpy as jnp
from jax.experimental import pallas as pl
from jax.experimental.pallas import tpu as pltpu

# ----------------------------- model sizes -----------------------------
B = 2        # batch
N = 16       # number of patch positions (pos-embedding table size)
K = 8        # context tokens per sequence
M = 8        # target tokens per sequence
D = 32       # input / output token dim
H = 64       # predictor hidden dim
F = 128      # MLP hidden dim
NUM_MASK_SETS = 2
DP = 128     # lane-dense (128-lane) padded output feature dim
SCALE = float(H) ** -0.5

SEQ_TILE = 8                 # sequences folded per grid step
ROWS_K = SEQ_TILE * B * K    # 128 context rows per tile
ROWS_M = SEQ_TILE * B * M    # 128 target rows per tile

# Static block-diagonal additive mask: target row (seq, b, m) may only attend
# to context columns of the same (seq, b).  Built once at trace time.
_row_blk = np.arange(ROWS_M) // M
_col_blk = np.arange(ROWS_K) // K
ATTN_MASK_ADD = np.where(_row_blk[:, None] == _col_blk[None, :],
                         0.0, -1e30).astype(np.float32)       # [ROWS_M, ROWS_K]


# ----------------------------- fused Pallas kernel -----------------------------
def _fused_predictor_kernel(x_ref, posx_ref, ty_ref, mask_ref,
                            wemb_ref, bemb_ref, w1_ref, b1_ref,
                            w2_ref, b2_ref, wp_ref, bp_ref,
                            out_ref):
    # context tokens -> predictor space (+ pos embeds)            [ROWS_K, H]
    z = jnp.dot(x_ref[...], wemb_ref[...], preferred_element_type=jnp.float32)
    z = z + bemb_ref[...] + posx_ref[...].astype(jnp.float32)
    z_b = z.astype(jnp.bfloat16)                                   # MXU operand

    # target tokens (mask token + pos embed, fused outside)       [ROWS_M, H]
    t_b = ty_ref[...]                                              # bf16 (MXU)
    t = t_b.astype(jnp.float32)                                    # f32 (residual)

    # block-diagonal attention over the folded (seq, batch) rows.
    # TODO(synk): if the profile shows a per-step XLU transpose here, pre-transpose
    # a copy of z once per tile and feed it to the score matmul only.
    s = jax.lax.dot_general(t_b, z_b, (((1,), (1,)), ((), ())),
                            preferred_element_type=jnp.float32) * SCALE
    s = s + mask_ref[...]                                          # static mask
    s = s - jnp.max(s, axis=-1, keepdims=True)
    p = jnp.exp(s)
    p = p * pl.reciprocal(jnp.sum(p, axis=-1, keepdims=True), approx=True)
    u = t + jnp.dot(p.astype(jnp.bfloat16), z_b,
                    preferred_element_type=jnp.float32)            # [ROWS_M, H]

    # row-wise MLP block with residual
    h1 = jnp.dot(u.astype(jnp.bfloat16), w1_ref[...],
                 preferred_element_type=jnp.float32) + b1_ref[...]
    h1 = jax.nn.gelu(h1, approximate=True)
    h = u + jnp.dot(h1.astype(jnp.bfloat16), w2_ref[...],
                    preferred_element_type=jnp.float32) + b2_ref[...]

    # project back to (lane-padded) token dim; unmasked 128-lane bf16 stores
    out = jnp.dot(h.astype(jnp.bfloat16), wp_ref[...],
                  preferred_element_type=jnp.float32) + bp_ref[...]
    out_ref[...] = out.astype(out_ref.dtype)                       # [ROWS_M, DP]


@functools.partial(jax.jit, static_argnames=("has_cls",))
def fused_predictor(params, x_all, mx_all, my_all, mask_idx, *, has_cls=False):
    """All (group, sequence) backbone calls fused into ONE pallas_call.

    x_all:    [S, B, K, D]  stacked context tokens
    mx_all:   [S, B, K]     context position indices
    my_all:   [S, B, M]     target position indices
    mask_idx: [S] int32     mask-set index of each sequence
    returns   [S, B, M, D]  float32
    """
    S = x_all.shape[0]
    off = 1 if has_cls else 0
    S_pad = pl.cdiv(S, SEQ_TILE) * SEQ_TILE
    pad_k = (S_pad - S) * B * K
    pad_m = (S_pad - S) * B * M

    # Index plumbing stays in XLA (fused gathers + one add).
    # TODO(synk): gathers could move in-kernel with a VMEM-resident pos table,
    # but dynamic in-kernel row gather is fragile; keep them outside.
    posx = jnp.take(params["pos"], mx_all + off, axis=0).reshape(S * B * K, H)
    ty = (params["mtok"][mask_idx][:, None, None, :]
          + jnp.take(params["pos"], my_all + off, axis=0)).reshape(S * B * M, H)
    xf = x_all.reshape(S * B * K, D)

    # Pad to a whole number of sequence tiles; padded rows are zeros (harmless:
    # they only attend within their own zero block and are sliced off below).
    xf = jnp.pad(xf, ((0, pad_k), (0, 0))).astype(jnp.bfloat16)
    posx = jnp.pad(posx, ((0, pad_k), (0, 0))).astype(jnp.bfloat16)
    ty = jnp.pad(ty, ((0, pad_m), (0, 0))).astype(jnp.bfloat16)

    wemb = params["wemb"].astype(jnp.bfloat16)
    w1 = params["w1"].astype(jnp.bfloat16)
    w2 = params["w2"].astype(jnp.bfloat16)
    wp_pad = jnp.pad(params["wp"], ((0, 0), (0, DP - D))).astype(jnp.bfloat16)
    bp_pad = jnp.pad(params["bp"], ((0, 0), (0, DP - D)))   # f32 bias, lane-dense
    mask_add = jnp.asarray(ATTN_MASK_ADD)

    grid_spec = pltpu.PrefetchScalarGridSpec(
        num_scalar_prefetch=0,
        grid=(S_pad // SEQ_TILE,),
        in_specs=[
            pl.BlockSpec((ROWS_K, D), lambda g: (g, 0)),      # x      (bf16)
            pl.BlockSpec((ROWS_K, H), lambda g: (g, 0)),      # posx   (bf16)
            pl.BlockSpec((ROWS_M, H), lambda g: (g, 0)),      # mtok+posy (bf16)
            pl.BlockSpec((ROWS_M, ROWS_K), lambda g: (0, 0)),  # static attn mask
            pl.BlockSpec((D, H),  lambda g: (0, 0)),           # W_emb (VMEM-resident)
            pl.BlockSpec((1, H),  lambda g: (0, 0)),           # b_emb
            pl.BlockSpec((H, F),  lambda g: (0, 0)),           # W1
            pl.BlockSpec((1, F),  lambda g: (0, 0)),           # b1
            pl.BlockSpec((F, H),  lambda g: (0, 0)),           # W2
            pl.BlockSpec((1, H),  lambda g: (0, 0)),           # b2
            pl.BlockSpec((H, DP), lambda g: (0, 0)),           # W_proj (lane-padded)
            pl.BlockSpec((1, DP), lambda g: (0, 0)),           # b_proj
        ],
        out_specs=pl.BlockSpec((ROWS_M, DP), lambda g: (g, 0)),
    )

    out = pl.pallas_call(
        _fused_predictor_kernel,
        out_shape=jax.ShapeDtypeStruct((S_pad * B * M, DP), jnp.bfloat16),
        grid_spec=grid_spec,
        compiler_params=pltpu.CompilerParams(
            # TODO(synk): on v7x verify the sequence-tile axis actually shards
            # across the 2 TensorCores; fall back to pl.core_map if it doesn't.
            dimension_semantics=("parallel",)),
    )(xf, posx, ty, mask_add,
      wemb, params["bemb"],
      w1, params["b1"],
      w2, params["b2"],
      wp_pad, bp_pad)

    out = out[:S * B * M, :D].astype(jnp.float32)
    return out.reshape(S, B, M, D)


# ----------------------------- pure-JAX reference (per sequence) -----------------------------
def predictor_backbone_ref(x, masks_x, masks_y, params, *, mask_index, has_cls=False):
    off = 1 if has_cls else 0
    posx = jnp.take(params["pos"], masks_x + off, axis=0)          # [B, K, H]
    posy = jnp.take(params["pos"], masks_y + off, axis=0)          # [B, M, H]
    z = x @ params["wemb"] + params["bemb"] + posx                 # [B, K, H]
    t = params["mtok"][mask_index][None, None, :] + posy           # [B, M, H]
    s = jnp.einsum("bmh,bkh->bmk", t, z) * SCALE
    p = jax.nn.softmax(s, axis=-1)
    u = t + jnp.einsum("bmk,bkh->bmh", p, z)
    h = u + jax.nn.gelu(u @ params["w1"] + params["b1"],
                        approximate=True) @ params["w2"] + params["b2"]
    return h @ params["wp"] + params["bp"]                         # [B, M, D]


# ----------------------------- wrapper (mirrors the PyTorch module) -----------------------------
class PredictorMultiSeqWrapper:
    """Same forward semantics as the PyTorch wrapper: for every (group i, seq j)
    it produces backbone(x[i][j], masks_x[i][j], masks_y[i][j], mask_index=i,
    has_cls=...).  All per-sequence backbone calls are batched into a single
    fused Pallas launch (SEQ_TILE sequences per grid step)."""

    def __init__(self, fused_backbone):
        # fused_backbone(x_all, mx_all, my_all, mask_idx, has_cls=...) -> [S, B, M, D]
        self.fused_backbone = fused_backbone

    def __call__(self, x, masks_x, masks_y, has_cls=False):
        flat_x, flat_mx, flat_my, flat_idx, counts = [], [], [], [], []
        for i, (xi, mxi, myi) in enumerate(zip(x, masks_x, masks_y)):
            counts.append(len(xi))
            for xij, mxij, myij in zip(xi, mxi, myi):
                flat_x.append(xij)
                flat_mx.append(mxij)
                flat_my.append(myij)
                flat_idx.append(i)

        x_all = jnp.stack(flat_x)                        # [S, B, K, D]
        mx_all = jnp.stack(flat_mx)                      # [S, B, K]
        my_all = jnp.stack(flat_my)                      # [S, B, M]
        mask_idx = jnp.array(flat_idx, dtype=jnp.int32)  # [S]

        out_all = self.fused_backbone(x_all, mx_all, my_all, mask_idx,
                                      has_cls=has_cls)   # [S, B, M, D]

        outs, n = [[] for _ in x], 0
        for i, c in enumerate(counts):
            for _ in range(c):
                outs[i].append(out_all[n])
                n += 1
        return outs


# ----------------------------- parameters & demo -----------------------------
def init_params(key):
    ks = jax.random.split(key, 8)
    s = 0.02
    return {
        "pos":  s * jax.random.normal(ks[0], (N + 1, H), jnp.float32),
        "mtok": s * jax.random.normal(ks[1], (NUM_MASK_SETS, H), jnp.float32),
        "wemb": s * jax.random.normal(ks[2], (D, H), jnp.float32),
        "bemb": jnp.zeros((1, H), jnp.float32),
        "w1":   s * jax.random.normal(ks[3], (H, F), jnp.float32),
        "b1":   jnp.zeros((1, F), jnp.float32),
        "w2":   s * jax.random.normal(ks[4], (F, H), jnp.float32),
        "b2":   jnp.zeros((1, H), jnp.float32),
        "wp":   s * jax.random.normal(ks[5], (H, D), jnp.float32),
        "bp":   jnp.zeros((1, D), jnp.float32),
    }


if __name__ == "__main__":
    root = jax.random.PRNGKey(0)
    pkey, dkey = jax.random.split(root)
    params = init_params(pkey)

    # Nested structure: 2 mask groups, group 0 has 2 sequences, group 1 has 1.
    seqs_per_group = [2, 1]
    x, masks_x, masks_y = [], [], []
    for i, n_seq in enumerate(seqs_per_group):
        xi, mxi, myi = [], [], []
        for j in range(n_seq):
            dkey, k1, k2, k3 = jax.random.split(dkey, 4)
            xi.append(jax.random.normal(k1, (B, K, D), jnp.float32))
            mxi.append(jax.random.randint(k2, (B, K), 0, N, jnp.int32))
            myi.append(jax.random.randint(k3, (B, M), 0, N, jnp.int32))
        x.append(xi); masks_x.append(mxi); masks_y.append(myi)

    wrapper = PredictorMultiSeqWrapper(functools.partial(fused_predictor, params))
    outs = wrapper(x, masks_x, masks_y, has_cls=False)
    outs = jax.tree_util.tree_map(jax.block_until_ready, outs)

    # correctness vs pure-JAX per-sequence reference
    # (tolerance covers the bf16 MXU operands / bf16 output store in the kernel)
    ok = True
    for i in range(len(x)):
        for j in range(len(x[i])):
            ref = predictor_backbone_ref(x[i][j], masks_x[i][j], masks_y[i][j],
                                         params, mask_index=i, has_cls=False)
            ok &= bool(jnp.allclose(outs[i][j], ref, atol=2e-3, rtol=1e-2))
    assert ok, "Pallas output mismatch vs reference"
    assert outs[0][0].shape == (B, M, D)
    assert len(outs) == len(x) and all(len(outs[i]) == len(x[i]) for i in range(len(x)))
    print("KERNEL_OK")
</pallas_src>

<mosaic_0001>
module attributes {stable_mosaic.version = 11 : i64} {
  func.func @_fused_predictor_kernel(%arg0: i32, %arg1: memref<128x32xbf16, #tpu.memory_space<vmem>>, %arg2: memref<128x64xbf16, #tpu.memory_space<vmem>>, %arg3: memref<128x64xbf16, #tpu.memory_space<vmem>>, %arg4: memref<128x128xf32, #tpu.memory_space<vmem>>, %arg5: memref<32x64xbf16, #tpu.memory_space<vmem>>, %arg6: memref<1x64xf32, #tpu.memory_space<vmem>>, %arg7: memref<64x128xbf16, #tpu.memory_space<vmem>>, %arg8: memref<1x128xf32, #tpu.memory_space<vmem>>, %arg9: memref<128x64xbf16, #tpu.memory_space<vmem>>, %arg10: memref<1x64xf32, #tpu.memory_space<vmem>>, %arg11: memref<64x128xbf16, #tpu.memory_space<vmem>>, %arg12: memref<1x128xf32, #tpu.memory_space<vmem>>, %arg13: memref<128x128xbf16, #tpu.memory_space<vmem>>) attributes {dimension_semantics = [#tpu.dimension_semantics<parallel>], iteration_bounds = array<i64: 1>, scalar_prefetch = 0 : i64, scratch_operands = 0 : i64, tpu.core_type = #tpu.core_type<tc>, window_params = [{transform_indices = @transform_0, window_bounds = array<i64: 128, 32>}, {transform_indices = @transform_1, window_bounds = array<i64: 128, 64>}, {transform_indices = @transform_2, window_bounds = array<i64: 128, 64>}, {pipeline_mode = #tpu.pipeline_mode<synchronous>, transform_indices = @transform_3, window_bounds = array<i64: 128, 128>}, {pipeline_mode = #tpu.pipeline_mode<synchronous>, transform_indices = @transform_4, window_bounds = array<i64: 32, 64>}, {pipeline_mode = #tpu.pipeline_mode<synchronous>, transform_indices = @transform_5, window_bounds = array<i64: 1, 64>}, {pipeline_mode = #tpu.pipeline_mode<synchronous>, transform_indices = @transform_6, window_bounds = array<i64: 64, 128>}, {pipeline_mode = #tpu.pipeline_mode<synchronous>, transform_indices = @transform_7, window_bounds = array<i64: 1, 128>}, {pipeline_mode = #tpu.pipeline_mode<synchronous>, transform_indices = @transform_8, window_bounds = array<i64: 128, 64>}, {pipeline_mode = #tpu.pipeline_mode<synchronous>, transform_indices = @transform_9, window_bounds = array<i64: 1, 64>}, {pipeline_mode = #tpu.pipeline_mode<synchronous>, transform_indices = @transform_10, window_bounds = array<i64: 64, 128>}, {pipeline_mode = #tpu.pipeline_mode<synchronous>, transform_indices = @transform_11, window_bounds = array<i64: 1, 128>}, {transform_indices = @transform_12, window_bounds = array<i64: 128, 128>}]} {
    %c0 = arith.constant 0 : index
    %c0_0 = arith.constant 0 : index
    %0 = vector.load %arg1[%c0, %c0_0] : memref<128x32xbf16, #tpu.memory_space<vmem>>, vector<128x32xbf16>
    %c0_1 = arith.constant 0 : index
    %c0_2 = arith.constant 0 : index
    %1 = vector.load %arg5[%c0_1, %c0_2] : memref<32x64xbf16, #tpu.memory_space<vmem>>, vector<32x64xbf16>
    %cst = arith.constant dense<0.000000e+00> : vector<128x64xf32>
    %2 = tpu.matmul %0, %1, %cst {dimension_numbers = #tpu.dot_dimension_numbers<[1], [0], [0], [1], [0, 0, 1, 1], [], []>} : vector<128x32xbf16>, vector<32x64xbf16>, vector<128x64xf32> -> vector<128x64xf32>
    %c0_3 = arith.constant 0 : index
    %c0_4 = arith.constant 0 : index
    %3 = vector.load %arg6[%c0_3, %c0_4] : memref<1x64xf32, #tpu.memory_space<vmem>>, vector<1x64xf32>
    %4 = vector.broadcast %3 : vector<1x64xf32> to vector<128x64xf32>
    %5 = arith.addf %2, %4 : vector<128x64xf32>
    %c0_5 = arith.constant 0 : index
    %c0_6 = arith.constant 0 : index
    %6 = vector.load %arg2[%c0_5, %c0_6] : memref<128x64xbf16, #tpu.memory_space<vmem>>, vector<128x64xbf16>
    %7 = arith.extf %6 : vector<128x64xbf16> to vector<128x64xf32>
    %8 = arith.addf %5, %7 : vector<128x64xf32>
    %9 = arith.truncf %8 : vector<128x64xf32> to vector<128x64xbf16>
    %c0_7 = arith.constant 0 : index
    %c0_8 = arith.constant 0 : index
    %10 = vector.load %arg3[%c0_7, %c0_8] : memref<128x64xbf16, #tpu.memory_space<vmem>>, vector<128x64xbf16>
    %11 = arith.extf %10 : vector<128x64xbf16> to vector<128x64xf32>
    %cst_9 = arith.constant dense<0.000000e+00> : vector<128x128xf32>
    %12 = tpu.matmul %10, %9, %cst_9 {dimension_numbers = #tpu.dot_dimension_numbers<[1], [1], [0], [0], [0, 0, 1, 0], [], []>} : vector<128x64xbf16>, vector<128x64xbf16>, vector<128x128xf32> -> vector<128x128xf32>
    %cst_10 = arith.constant 1.250000e-01 : f32
    %13 = vector.broadcast %cst_10 : f32 to vector<128x128xf32>
    %14 = arith.mulf %12, %13 : vector<128x128xf32>
    %c0_11 = arith.constant 0 : index
    %c0_12 = arith.constant 0 : index
    %15 = vector.load %arg4[%c0_11, %c0_12] : memref<128x128xf32, #tpu.memory_space<vmem>>, vector<128x128xf32>
    %16 = arith.addf %14, %15 : vector<128x128xf32>
    %cst_13 = arith.constant dense<0xFF800000> : vector<128xf32>
    %17 = vector.multi_reduction <maximumf>, %16, %cst_13 [1] : vector<128x128xf32> to vector<128xf32>
    %18 = vector.shape_cast %17 : vector<128xf32> to vector<128x1xf32>
    %19 = vector.broadcast %18 : vector<128x1xf32> to vector<128x128xf32>
    %20 = arith.subf %16, %19 : vector<128x128xf32>
    %21 = math.exp %20 : vector<128x128xf32>
    %cst_14 = arith.constant dense<0.000000e+00> : vector<128xf32>
    %22 = vector.multi_reduction <add>, %21, %cst_14 [1] : vector<128x128xf32> to vector<128xf32>
    %23 = vector.shape_cast %22 : vector<128xf32> to vector<128x1xf32>
    %24 = tpu.reciprocal %23 {approx = true} : vector<128x1xf32> -> vector<128x1xf32>
    %25 = vector.broadcast %24 : vector<128x1xf32> to vector<128x128xf32>
    %26 = arith.mulf %21, %25 : vector<128x128xf32>
    %27 = arith.truncf %26 : vector<128x128xf32> to vector<128x128xbf16>
    %cst_15 = arith.constant dense<0.000000e+00> : vector<128x64xf32>
    %28 = tpu.matmul %27, %9, %cst_15 {dimension_numbers = #tpu.dot_dimension_numbers<[1], [0], [0], [1], [0, 0, 1, 1], [], []>} : vector<128x128xbf16>, vector<128x64xbf16>, vector<128x64xf32> -> vector<128x64xf32>
    %29 = arith.addf %11, %28 : vector<128x64xf32>
    %30 = arith.truncf %29 : vector<128x64xf32> to vector<128x64xbf16>
    %c0_16 = arith.constant 0 : index
    %c0_17 = arith.constant 0 : index
    %31 = vector.load %arg7[%c0_16, %c0_17] : memref<64x128xbf16, #tpu.memory_space<vmem>>, vector<64x128xbf16>
    %cst_18 = arith.constant dense<0.000000e+00> : vector<128x128xf32>
    %32 = tpu.matmul %30, %31, %cst_18 {dimension_numbers = #tpu.dot_dimension_numbers<[1], [0], [0], [1], [0, 0, 1, 1], [], []>} : vector<128x64xbf16>, vector<64x128xbf16>, vector<128x128xf32> -> vector<128x128xf32>
    %c0_19 = arith.constant 0 : index
    %c0_20 = arith.constant 0 : index
    %33 = vector.load %arg8[%c0_19, %c0_20] : memref<1x128xf32, #tpu.memory_space<vmem>>, vector<1x128xf32>
    %34 = vector.broadcast %33 : vector<1x128xf32> to vector<128x128xf32>
    %35 = arith.addf %32, %34 : vector<128x128xf32>
    %36 = arith.mulf %35, %35 : vector<128x128xf32>
    %37 = arith.mulf %35, %36 : vector<128x128xf32>
    %cst_21 = arith.constant 4.471500e-02 : f32
    %38 = vector.broadcast %cst_21 : f32 to vector<128x128xf32>
    %39 = arith.mulf %38, %37 : vector<128x128xf32>
    %40 = arith.addf %35, %39 : vector<128x128xf32>
    %cst_22 = arith.constant 0.797884583 : f32
    %41 = vector.broadcast %cst_22 : f32 to vector<128x128xf32>
    %42 = arith.mulf %41, %40 : vector<128x128xf32>
    %43 = math.tanh %42 : vector<128x128xf32>
    %cst_23 = arith.constant 1.000000e+00 : f32
    %44 = vector.broadcast %cst_23 : f32 to vector<128x128xf32>
    %45 = arith.addf %44, %43 : vector<128x128xf32>
    %cst_24 = arith.constant 5.000000e-01 : f32
    %46 = vector.broadcast %cst_24 : f32 to vector<128x128xf32>
    %47 = arith.mulf %46, %45 : vector<128x128xf32>
    %48 = arith.mulf %35, %47 : vector<128x128xf32>
    %49 = arith.truncf %48 : vector<128x128xf32> to vector<128x128xbf16>
    %c0_25 = arith.constant 0 : index
    %c0_26 = arith.constant 0 : index
    %50 = vector.load %arg9[%c0_25, %c0_26] : memref<128x64xbf16, #tpu.memory_space<vmem>>, vector<128x64xbf16>
    %cst_27 = arith.constant dense<0.000000e+00> : vector<128x64xf32>
    %51 = tpu.matmul %49, %50, %cst_27 {dimension_numbers = #tpu.dot_dimension_numbers<[1], [0], [0], [1], [0, 0, 1, 1], [], []>} : vector<128x128xbf16>, vector<128x64xbf16>, vector<128x64xf32> -> vector<128x64xf32>
    %52 = arith.addf %29, %51 : vector<128x64xf32>
    %c0_28 = arith.constant 0 : index
    %c0_29 = arith.constant 0 : index
    %53 = vector.load %arg10[%c0_28, %c0_29] : memref<1x64xf32, #tpu.memory_space<vmem>>, vector<1x64xf32>
    %54 = vector.broadcast %53 : vector<1x64xf32> to vector<128x64xf32>
    %55 = arith.addf %52, %54 : vector<128x64xf32>
    %56 = arith.truncf %55 : vector<128x64xf32> to vector<128x64xbf16>
    %c0_30 = arith.constant 0 : index
    %c0_31 = arith.constant 0 : index
    %57 = vector.load %arg11[%c0_30, %c0_31] : memref<64x128xbf16, #tpu.memory_space<vmem>>, vector<64x128xbf16>
    %cst_32 = arith.constant dense<0.000000e+00> : vector<128x128xf32>
    %58 = tpu.matmul %56, %57, %cst_32 {dimension_numbers = #tpu.dot_dimension_numbers<[1], [0], [0], [1], [0, 0, 1, 1], [], []>} : vector<128x64xbf16>, vector<64x128xbf16>, vector<128x128xf32> -> vector<128x128xf32>
    %c0_33 = arith.constant 0 : index
    %c0_34 = arith.constant 0 : index
    %59 = vector.load %arg12[%c0_33, %c0_34] : memref<1x128xf32, #tpu.memory_space<vmem>>, vector<1x128xf32>
    %60 = vector.broadcast %59 : vector<1x128xf32> to vector<128x128xf32>
    %61 = arith.addf %58, %60 : vector<128x128xf32>
    %62 = arith.truncf %61 : vector<128x128xf32> to vector<128x128xbf16>
    %c0_35 = arith.constant 0 : index
    %c0_36 = arith.constant 0 : index
    %63 = vector.load %arg13[%c0_35, %c0_36] : memref<128x128xbf16, #tpu.memory_space<vmem>>, vector<128x128xbf16>
    tpu.vector_store %arg13[%c0_35, %c0_36], %62 {strides = array<i32>} : memref<128x128xbf16, #tpu.memory_space<vmem>>, vector<128x128xbf16>,
    return
  }
  func.func @transform_0(%arg0: i32) -> (i32, i32) {
    %c0_i32 = arith.constant 0 : i32
    %c0_i32_0 = arith.constant 0 : i32
    return %arg0, %c0_i32 : i32, i32
  }
  func.func @transform_1(%arg0: i32) -> (i32, i32) {
    %c0_i32 = arith.constant 0 : i32
    %c0_i32_0 = arith.constant 0 : i32
    return %arg0, %c0_i32 : i32, i32
  }
  func.func @transform_2(%arg0: i32) -> (i32, i32) {
    %c0_i32 = arith.constant 0 : i32
    %c0_i32_0 = arith.constant 0 : i32
    return %arg0, %c0_i32 : i32, i32
  }
  func.func @transform_3(%arg0: i32) -> (i32, i32) {
    %c0_i32 = arith.constant 0 : i32
    %c0_i32_0 = arith.constant 0 : i32
    %c0_i32_1 = arith.constant 0 : i32
    return %c0_i32, %c0_i32_0 : i32, i32
  }
  func.func @transform_4(%arg0: i32) -> (i32, i32) {
    %c0_i32 = arith.constant 0 : i32
    %c0_i32_0 = arith.constant 0 : i32
    %c0_i32_1 = arith.constant 0 : i32
    return %c0_i32, %c0_i32_0 : i32, i32
  }
  func.func @transform_5(%arg0: i32) -> (i32, i32) {
    %c0_i32 = arith.constant 0 : i32
    %c0_i32_0 = arith.constant 0 : i32
    %c0_i32_1 = arith.constant 0 : i32
    return %c0_i32, %c0_i32_0 : i32, i32
  }
  func.func @transform_6(%arg0: i32) -> (i32, i32) {
    %c0_i32 = arith.constant 0 : i32
    %c0_i32_0 = arith.constant 0 : i32
    %c0_i32_1 = arith.constant 0 : i32
    return %c0_i32, %c0_i32_0 : i32, i32
  }
  func.func @transform_7(%arg0: i32) -> (i32, i32) {
    %c0_i32 = arith.constant 0 : i32
    %c0_i32_0 = arith.constant 0 : i32
    %c0_i32_1 = arith.constant 0 : i32
    return %c0_i32, %c0_i32_0 : i32, i32
  }
  func.func @transform_8(%arg0: i32) -> (i32, i32) {
    %c0_i32 = arith.constant 0 : i32
    %c0_i32_0 = arith.constant 0 : i32
    %c0_i32_1 = arith.constant 0 : i32
    return %c0_i32, %c0_i32_0 : i32, i32
  }
  func.func @transform_9(%arg0: i32) -> (i32, i32) {
    %c0_i32 = arith.constant 0 : i32
    %c0_i32_0 = arith.constant 0 : i32
    %c0_i32_1 = arith.constant 0 : i32
    return %c0_i32, %c0_i32_0 : i32, i32
  }
  func.func @transform_10(%arg0: i32) -> (i32, i32) {
    %c0_i32 = arith.constant 0 : i32
    %c0_i32_0 = arith.constant 0 : i32
    %c0_i32_1 = arith.constant 0 : i32
    return %c0_i32, %c0_i32_0 : i32, i32
  }
  func.func @transform_11(%arg0: i32) -> (i32, i32) {
    %c0_i32 = arith.constant 0 : i32
    %c0_i32_0 = arith.constant 0 : i32
    %c0_i32_1 = arith.constant 0 : i32
    return %c0_i32, %c0_i32_0 : i32, i32
  }
  func.func @transform_12(%arg0: i32) -> (i32, i32) {
    %c0_i32 = arith.constant 0 : i32
    %c0_i32_0 = arith.constant 0 : i32
    return %arg0, %c0_i32 : i32, i32
  }
}

</mosaic_0001>

<llo_original>
// kernel: fused_predictor.1
$region0: #{fused_predictor.1}
  #allocation0 [shape = 'u32[]', space=smem, size = 0x4, offset = 0x4, fixed_abs, tag = 'smem constant byte address 0x4 - core index']
  #allocation1 [shape = 'u32[144,128]{1,0:T(1,128)}', space=vmem, size = 0x12000, scoped, tag = 'internal scratch']
  %s0 = inlined_call_operand.vmem [shape: bf16[128,32], index: 0, kind: input, shape index: {}]
  %s1 = inlined_call_operand.vmem [shape: bf16[128,64], index: 1, kind: input, shape index: {}]
  %s2 = inlined_call_operand.vmem [shape: bf16[128,64], index: 2, kind: input, shape index: {}]
  %s3 = inlined_call_operand.vmem [shape: f32[128,128], index: 3, kind: input, shape index: {}]
  %s4 = inlined_call_operand.vmem [shape: bf16[32,64], index: 4, kind: input, shape index: {}]
  %s5 = inlined_call_operand.vmem [shape: f32[1,64], index: 5, kind: input, shape index: {}]
  %s6 = inlined_call_operand.vmem [shape: bf16[64,128], index: 6, kind: input, shape index: {}]
  %s7 = inlined_call_operand.vmem [shape: f32[1,128], index: 7, kind: input, shape index: {}]
  %s8 = inlined_call_operand.vmem [shape: bf16[128,64], index: 8, kind: input, shape index: {}]
  %s9 = inlined_call_operand.vmem [shape: f32[1,64], index: 9, kind: input, shape index: {}]
  %s10 = inlined_call_operand.vmem [shape: bf16[64,128], index: 10, kind: input, shape index: {}]
  %s11 = inlined_call_operand.vmem [shape: f32[1,128], index: 11, kind: input, shape index: {}]
  %s12 = inlined_call_operand.vmem [shape: bf16[128,128], index: 12, kind: output, shape index: {}]
  %s13 = sld [smem:[#allocation0]]
  $region58: #{fused_predictor.1} parent=0
    _
  %s15 = ssub.s32 1, %s13
  %s16 = scalar_select 0, %s15, %s13
  // Predicated region
  $region2: #{fused_predictor.1} parent=0 // pred_check
    _
  $region3: #{fused_predictor.1} parent=0 // pred_check_branch
    %18 = sbr.rel (0) target = $region5
  $region4: #{fused_predictor.1} parent=0 // pred_region
    _
  $region5: #{fused_predictor.1} parent=0 // pred_fallthru
    _
  // Predicated region
  $region6: #{fused_predictor.1} parent=0 // pred_check
    _
  $region7: #{fused_predictor.1} parent=0 // pred_check_branch
    %20 = sbr.rel (0) target = $region9
  $region8: #{fused_predictor.1} parent=0 // pred_region
    _
  $region9: #{fused_predictor.1} parent=0 // pred_fallthru
    _
  // Predicated region
  $region10: #{fused_predictor.1} parent=0 // pred_check
    _
  $region11: #{fused_predictor.1} parent=0 // pred_check_branch
    %22 = sbr.rel (0) target = $region13
  $region12: #{fused_predictor.1} parent=0 // pred_region
    _
  $region13: #{fused_predictor.1} parent=0 // pred_fallthru
    _
  // Predicated region
  $region14: #{fused_predictor.1} parent=0 // pred_check
    _
  $region15: #{fused_predictor.1} parent=0 // pred_check_branch
    %24 = sbr.rel (0) target = $region17
  $region16: #{fused_predictor.1} parent=0 // pred_region
    _
  $region17: #{fused_predictor.1} parent=0 // pred_fallthru
    _
  // Predicated region
  $region18: #{fused_predictor.1} parent=0 // pred_check
    _
  $region19: #{fused_predictor.1} parent=0 // pred_check_branch
    %26 = sbr.rel (0) target = $region21
  $region20: #{fused_predictor.1} parent=0 // pred_region
    _
  $region21: #{fused_predictor.1} parent=0 // pred_fallthru
    _
  // Predicated region
  $region22: #{fused_predictor.1} parent=0 // pred_check
    _
  $region23: #{fused_predictor.1} parent=0 // pred_check_branch
    %28 = sbr.rel (0) target = $region25
  $region24: #{fused_predictor.1} parent=0 // pred_region
    _
  $region25: #{fused_predictor.1} parent=0 // pred_fallthru
    _
  // Predicated region
  $region26: #{fused_predictor.1} parent=0 // pred_check
    _
  $region27: #{fused_predictor.1} parent=0 // pred_check_branch
    %30 = sbr.rel (0) target = $region29
  $region28: #{fused_predictor.1} parent=0 // pred_region
    _
  $region29: #{fused_predictor.1} parent=0 // pred_fallthru
    _
  // Predicated region
  $region30: #{fused_predictor.1} parent=0 // pred_check
    _
  $region31: #{fused_predictor.1} parent=0 // pred_check_branch
    %32 = sbr.rel (0) target = $region33
  $region32: #{fused_predictor.1} parent=0 // pred_region
    _
  $region33: #{fused_predictor.1} parent=0 // pred_fallthru
    _
  // Predicated region
  $region34: #{fused_predictor.1} parent=0 // pred_check
    _
  $region35: #{fused_predictor.1} parent=0 // pred_check_branch
    %34 = sbr.rel (0) target = $region37
  $region36: #{fused_predictor.1} parent=0 // pred_region
    _
  $region37: #{fused_predictor.1} parent=0 // pred_fallthru
    _
  // Predicated region
  $region38: #{fused_predictor.1} parent=0 // pred_check
    _
  $region39: #{fused_predictor.1} parent=0 // pred_check_branch
    %36 = sbr.rel (0) target = $region41
  $region40: #{fused_predictor.1} parent=0 // pred_region
    _
  $region41: #{fused_predictor.1} parent=0 // pred_fallthru
    _
  // Predicated region
  $region42: #{fused_predictor.1} parent=0 // pred_check
    _
  $region43: #{fused_predictor.1} parent=0 // pred_check_branch
    %38 = sbr.rel (0) target = $region45
  $region44: #{fused_predictor.1} parent=0 // pred_region
    _
  $region45: #{fused_predictor.1} parent=0 // pred_fallthru
    _
  // Predicated region
  $region46: #{fused_predictor.1} parent=0 // pred_check
    _
  $region47: #{fused_predictor.1} parent=0 // pred_check_branch
    %40 = sbr.rel (0) target = $region49
  $region48: #{fused_predictor.1} parent=0 // pred_region
    _
  $region49: #{fused_predictor.1} parent=0 // pred_fallthru
    _
  %v42 = vld [vmem:[%s0] sm:$0xf]
  %v43 = vld [vmem:[%s0 + $0x4] sm:$0xf]
  %v44 = vld [vmem:[%s0 + $0x8] sm:$0xf]
  %v45 = vld [vmem:[%s0 + $0xc] sm:$0xf]
  %v46 = vld [vmem:[%s0 + $0x10] sm:$0xf]
  %v47 = vld [vmem:[%s0 + $0x14] sm:$0xf]
  %v48 = vld [vmem:[%s0 + $0x18] sm:$0xf]
  %v49 = vld [vmem:[%s0 + $0x1c] sm:$0xf]
  %v50 = vld [vmem:[%s0 + $0x20] sm:$0xf]
  %v51 = vld [vmem:[%s0 + $0x24] sm:$0xf]
  %v52 = vld [vmem:[%s0 + $0x28] sm:$0xf]
  %v53 = vld [vmem:[%s0 + $0x2c] sm:$0xf]
  %v54 = vld [vmem:[%s0 + $0x30] sm:$0xf]
  %v55 = vld [vmem:[%s0 + $0x34] sm:$0xf]
  %v56 = vld [vmem:[%s0 + $0x38] sm:$0xf]
  %v57 = vld [vmem:[%s0 + $0x3c] sm:$0xf]
  %v58 = vld [vmem:[%s4] sm:$0xf]
  %v59 = vld [vmem:[%s4 + $0x4] sm:$0xf]
  %v60 = vld [vmem:[%s4 + $0x8] sm:$0xf]
  %v61 = vld [vmem:[%s4 + $0xc] sm:$0xf]
  %v62 = vld [vmem:[%s5] sm:$0x1]
  %v64 = vlaneseq
  %v65 = vshrl.u32 %v64, 7
  %v66 = vsub.s32 0, %v65
  %v67 = vrot.slane %v62, %v66
  %v85 = vunpack.c.l.b16 %v42
  %v86 = vunpack.c.l.b16 %v43
  %v87 = vunpack.c.l.b16 %v44
  %v88 = vunpack.c.l.b16 %v45
  %v89 = vunpack.c.l.b16 %v46
  %v90 = vunpack.c.l.b16 %v47
  %v91 = vunpack.c.l.b16 %v48
  %v92 = vunpack.c.l.b16 %v49
  %v93 = vunpack.c.l.b16 %v50
  %v94 = vunpack.c.l.b16 %v51
  %v95 = vunpack.c.l.b16 %v52
  %v96 = vunpack.c.l.b16 %v53
  %v97 = vunpack.c.l.b16 %v54
  %v98 = vunpack.c.l.b16 %v55
  %v99 = vunpack.c.l.b16 %v56
  %v100 = vunpack.c.l.b16 %v57
  %v101 = vpack.c.b16 %v86, %v85
  %v102 = vpack.c.b16 %v88, %v87
  %v103 = vpack.c.b16 %v90, %v89
  %v104 = vpack.c.b16 %v92, %v91
  %v105 = vpack.c.b16 %v94, %v93
  %v106 = vpack.c.b16 %v96, %v95
  %v107 = vpack.c.b16 %v98, %v97
  %v108 = vpack.c.b16 %v100, %v99
  %v113 = vunpack.c.l.b16 %v58
  %v114 = vunpack.c.l.b16 %v59
  %v115 = vunpack.c.l.b16 %v60
  %v116 = vunpack.c.l.b16 %v61
  %v117 = vpack.c.b16 %v114, %v113
  %v118 = vpack.c.b16 %v116, %v115
  %vm121 = vcmask 261120
  %v123 = vsel %vm121, %v101, 0
  %v126 = vsel %vm121, %v102, 0
  %v129 = vsel %vm121, %v103, 0
  %v132 = vsel %vm121, %v104, 0
  %v135 = vsel %vm121, %v105, 0
  %v138 = vsel %vm121, %v106, 0
  %v141 = vsel %vm121, %v107, 0
  %v144 = vsel %vm121, %v108, 0
  %146 = vmatprep.subr.bf16.mxu0 0
  %147 = vmatpush1.bf16.msra.mxu0 0
  %148 = vmatprep.subr.bf16.mxu0 0
  %149 = vmatpush1.bf16.msra.mxu0 0
  %150 = vmatprep.subr.bf16.mxu0 0
  %151 = vmatpush1.bf16.msra.mxu0 0
  %152 = vmatprep.subr.bf16.mxu0 0
  %153 = vmatpush1.bf16.msra.mxu0 0
  %154 = vmatprep.subr.bf16.mxu0 0
  %155 = vmatpush1.bf16.msra.mxu0 0
  %156 = vmatprep.subr.bf16.mxu0 0
  %157 = vmatpush1.bf16.msra.mxu0 0
  %158 = vmatprep.subr.bf16.mxu0 0
  %159 = vmatpush1.bf16.msra.mxu0 %v118
  %160 = vmatprep.subr.bf16.mxu0 0
  %161 = vmatpush1.bf16.msra.mxu0 %v117
  %162 = vmatprep.subr.bf16.mxu0 0
  %163 = vmatpush2.bf16.msra.mxu0 0
  %164 = vmatprep.subr.bf16.mxu0 0
  %165 = vmatpush2.bf16.msra.mxu0 0
  %166 = vmatprep.subr.bf16.mxu0 0
  %167 = vmatpush2.bf16.msra.mxu0 0
  %168 = vmatprep.subr.bf16.mxu0 0
  %169 = vmatpush2.bf16.msra.mxu0 0
  %170 = vmatprep.subr.bf16.mxu0 0
  %171 = vmatpush2.bf16.msra.mxu0 0
  %172 = vmatprep.subr.bf16.mxu0 0
  %173 = vmatpush2.bf16.msra.mxu0 0
  %174 = vmatprep.subr.bf16.mxu0 0
  %175 = vmatpush2.bf16.msra.mxu0 0
  %176 = vmatprep.subr.bf16.mxu0 0
  %177 = vmatpush2.bf16.msra.mxu0 0
  %178 = vmatprep.mubr.bf16.mxu0 0
  %179 = vmatmul.mubr.bf16.gmra.mxu0 %v123
  %v180 = vpop.f32.mrf.mxu0
  %v181 = vadd.f32 %v67, %v180
  %v182 = vpop.f32.mrf.mxu0
  %v183 = vpop.f32.mrf.mxu0
  %v184 = vadd.f32 %v67, %v183
  %v185 = vpop.f32.mrf.mxu0
  %186 = vmatprep.mubr.bf16.mxu0 0
  %187 = vmatmul.mubr.bf16.gmra.mxu0 %v126
  %v188 = vpop.f32.mrf.mxu0
  %v189 = vadd.f32 %v67, %v188
  %v190 = vpop.f32.mrf.mxu0
  %v191 = vpop.f32.mrf.mxu0
  %v192 = vadd.f32 %v67, %v191
  %v193 = vpop.f32.mrf.mxu0
  %194 = vmatprep.mubr.bf16.mxu0 0
  %195 = vmatmul.mubr.bf16.gmra.mxu0 %v129
  %v196 = vpop.f32.mrf.mxu0
  %v197 = vadd.f32 %v67, %v196
  %v198 = vpop.f32.mrf.mxu0
  %v199 = vpop.f32.mrf.mxu0
  %v200 = vadd.f32 %v67, %v199
  %v201 = vpop.f32.mrf.mxu0
  %202 = vmatprep.mubr.bf16.mxu0 0
  %203 = vmatmul.mubr.bf16.gmra.mxu0 %v132
  %v204 = vpop.f32.mrf.mxu0
  %v205 = vadd.f32 %v67, %v204
  %v206 = vpop.f32.mrf.mxu0
  %v207 = vpop.f32.mrf.mxu0
  %v208 = vadd.f32 %v67, %v207
  %v209 = vpop.f32.mrf.mxu0
  %210 = vmatprep.mubr.bf16.mxu0 0
  %211 = vmatmul.mubr.bf16.gmra.mxu0 %v135
  %v212 = vpop.f32.mrf.mxu0
  %v213 = vadd.f32 %v67, %v212
  %v214 = vpop.f32.mrf.mxu0
  %v215 = vpop.f32.mrf.mxu0
  %v216 = vadd.f32 %v67, %v215
  %v217 = vpop.f32.mrf.mxu0
  %218 = vmatprep.mubr.bf16.mxu0 0
  %219 = vmatmul.mubr.bf16.gmra.mxu0 %v138
  %v220 = vpop.f32.mrf.mxu0
  %v221 = vadd.f32 %v67, %v220
  %v222 = vpop.f32.mrf.mxu0
  %v223 = vpop.f32.mrf.mxu0
  %v224 = vadd.f32 %v67, %v223
  %v225 = vpop.f32.mrf.mxu0
  %226 = vmatprep.mubr.bf16.mxu0 0
  %227 = vmatmul.mubr.bf16.gmra.mxu0 %v141
  %v228 = vpop.f32.mrf.mxu0
  %v229 = vadd.f32 %v67, %v228
  %v230 = vpop.f32.mrf.mxu0
  %v231 = vpop.f32.mrf.mxu0
  %v232 = vadd.f32 %v67, %v231
  %v233 = vpop.f32.mrf.mxu0
  %234 = vmatprep.mubr.bf16.mxu0 0
  %235 = vmatmul.mubr.bf16.gmra.mxu0 %v144
  %v236 = vpop.f32.mrf.mxu0
  %v237 = vadd.f32 %v67, %v236
  %v238 = vpop.f32.mrf.mxu0
  %v239 = vpop.f32.mrf.mxu0
  %v240 = vadd.f32 %v67, %v239
  %v241 = vpop.f32.mrf.mxu0
  %242 = vdwg.mxu0
  %v243 = vld [vmem:[%s1] sm:$0xf]
  %v244 = vld [vmem:[%s1 + $0x4] sm:$0xf]
  %v245 = vld [vmem:[%s1 + $0x8] sm:$0xf]
  %v246 = vld [vmem:[%s1 + $0xc] sm:$0xf]
  %v247 = vld [vmem:[%s1 + $0x10] sm:$0xf]
  %v248 = vld [vmem:[%s1 + $0x14] sm:$0xf]
  %v249 = vld [vmem:[%s1 + $0x18] sm:$0xf]
  %v250 = vld [vmem:[%s1 + $0x1c] sm:$0xf]
  %v251 = vld [vmem:[%s1 + $0x20] sm:$0xf]
  %v252 = vld [vmem:[%s1 + $0x24] sm:$0xf]
  %v253 = vld [vmem:[%s1 + $0x28] sm:$0xf]
  %v254 = vld [vmem:[%s1 + $0x2c] sm:$0xf]
  %v255 = vld [vmem:[%s1 + $0x30] sm:$0xf]
  %v256 = vld [vmem:[%s1 + $0x34] sm:$0xf]
  %v257 = vld [vmem:[%s1 + $0x38] sm:$0xf]
  %v258 = vld [vmem:[%s1 + $0x3c] sm:$0xf]
  %v259 = vunpack.c.l.bf16 %v243
  %v260 = vunpack.c.l.bf16 %v244
  %v261 = vunpack.c.l.bf16 %v245
  %v262 = vunpack.c.l.bf16 %v246
  %v263 = vunpack.c.l.bf16 %v247
  %v264 = vunpack.c.l.bf16 %v248
  %v265 = vunpack.c.l.bf16 %v249
  %v266 = vunpack.c.l.bf16 %v250
  %v267 = vunpack.c.l.bf16 %v251
  %v268 = vunpack.c.l.bf16 %v252
  %v269 = vunpack.c.l.bf16 %v253
  %v270 = vunpack.c.l.bf16 %v254
  %v271 = vunpack.c.l.bf16 %v255
  %v272 = vunpack.c.l.bf16 %v256
  %v273 = vunpack.c.l.bf16 %v257
  %v274 = vunpack.c.l.bf16 %v258
  %v275 = vadd.f32 %v181, %v259
  %v276 = vadd.f32 %v184, %v260
  %v277 = vadd.f32 %v189, %v261
  %v278 = vadd.f32 %v192, %v262
  %v279 = vadd.f32 %v197, %v263
  %v280 = vadd.f32 %v200, %v264
  %v281 = vadd.f32 %v205, %v265
  %v282 = vadd.f32 %v208, %v266
  %v283 = vadd.f32 %v213, %v267
  %v284 = vadd.f32 %v216, %v268
  %v285 = vadd.f32 %v221, %v269
  %v286 = vadd.f32 %v224, %v270
  %v287 = vadd.f32 %v229, %v271
  %v288 = vadd.f32 %v232, %v272
  %v289 = vadd.f32 %v237, %v273
  %v290 = vadd.f32 %v240, %v274
  %v291 = vpack.c.bf16 %v276, %v275
  %v292 = vpack.c.bf16 %v278, %v277
  %v293 = vpack.c.bf16 %v280, %v279
  %v294 = vpack.c.bf16 %v282, %v281
  %v295 = vpack.c.bf16 %v284, %v283
  %v296 = vpack.c.bf16 %v286, %v285
  %v297 = vpack.c.bf16 %v288, %v287
  %v298 = vpack.c.bf16 %v290, %v289
  %v299 = vld [vmem:[%s2] sm:$0xf]
  %v300 = vld [vmem:[%s2 + $0x4] sm:$0xf]
  %v301 = vld [vmem:[%s2 + $0x8] sm:$0xf]
  %v302 = vld [vmem:[%s2 + $0xc] sm:$0xf]
  %v303 = vld [vmem:[%s2 + $0x10] sm:$0xf]
  %v304 = vld [vmem:[%s2 + $0x14] sm:$0xf]
  %v305 = vld [vmem:[%s2 + $0x18] sm:$0xf]
  %v306 = vld [vmem:[%s2 + $0x1c] sm:$0xf]
  %v307 = vld [vmem:[%s2 + $0x20] sm:$0xf]
  %v308 = vld [vmem:[%s2 + $0x24] sm:$0xf]
  %v309 = vld [vmem:[%s2 + $0x28] sm:$0xf]
  %v310 = vld [vmem:[%s2 + $0x2c] sm:$0xf]
  %v311 = vld [vmem:[%s2 + $0x30] sm:$0xf]
  %v312 = vld [vmem:[%s2 + $0x34] sm:$0xf]
  %v313 = vld [vmem:[%s2 + $0x38] sm:$0xf]
  %v314 = vld [vmem:[%s2 + $0x3c] sm:$0xf]
  %v315 = vunpack.c.l.bf16 %v299
  %v316 = vunpack.c.l.bf16 %v300
  %v317 = vunpack.c.l.bf16 %v301
  %v318 = vunpack.c.l.bf16 %v302
  %v319 = vunpack.c.l.bf16 %v303
  %v320 = vunpack.c.l.bf16 %v304
  %v321 = vunpack.c.l.bf16 %v305
  %v322 = vunpack.c.l.bf16 %v306
  %v323 = vunpack.c.l.bf16 %v307
  %v324 = vunpack.c.l.bf16 %v308
  %v325 = vunpack.c.l.bf16 %v309
  %v326 = vunpack.c.l.bf16 %v310
  %v327 = vunpack.c.l.bf16 %v311
  %v328 = vunpack.c.l.bf16 %v312
  %v329 = vunpack.c.l.bf16 %v313
  %v330 = vunpack.c.l.bf16 %v314
  %v347 = vunpack.c.l.b16 %v299
  %v348 = vunpack.c.l.b16 %v300
  %v349 = vunpack.c.l.b16 %v301
  %v350 = vunpack.c.l.b16 %v302
  %v351 = vunpack.c.l.b16 %v303
  %v352 = vunpack.c.l.b16 %v304
  %v353 = vunpack.c.l.b16 %v305
  %v354 = vunpack.c.l.b16 %v306
  %v355 = vunpack.c.l.b16 %v307
  %v356 = vunpack.c.l.b16 %v308
  %v357 = vunpack.c.l.b16 %v309
  %v358 = vunpack.c.l.b16 %v310
  %v359 = vunpack.c.l.b16 %v311
  %v360 = vunpack.c.l.b16 %v312
  %v361 = vunpack.c.l.b16 %v313
  %v362 = vunpack.c.l.b16 %v314
  %v363 = vpack.c.b16 %v348, %v347
  %v364 = vpack.c.b16 %v350, %v349
  %v365 = vpack.c.b16 %v352, %v351
  %v366 = vpack.c.b16 %v354, %v353
  %v367 = vpack.c.b16 %v356, %v355
  %v368 = vpack.c.b16 %v358, %v357
  %v369 = vpack.c.b16 %v360, %v359
  %v370 = vpack.c.b16 %v362, %v361
  %vm371 = vcmask 523264
  %v373 = vsel %vm371, %v363, 0
  %v376 = vsel %vm371, %v364, 0
  %v379 = vsel %vm371, %v365, 0
  %v382 = vsel %vm371, %v366, 0
  %v385 = vsel %vm371, %v367, 0
  %v388 = vsel %vm371, %v368, 0
  %v391 = vsel %vm371, %v369, 0
  %v394 = vsel %vm371, %v370, 0
  %v397 = vsel %vm371, %v291, 0
  %v400 = vsel %vm371, %v292, 0
  %v403 = vsel %vm371, %v293, 0
  %v406 = vsel %vm371, %v294, 0
  %v409 = vsel %vm371, %v295, 0
  %v412 = vsel %vm371, %v296, 0
  %v415 = vsel %vm371, %v297, 0
  %v418 = vsel %vm371, %v298, 0
  %420 = vmatprep.subr.bf16.mxu0 0
  %421 = vmatpush1.bf16.xpose.msra.mxu0 %v418
  %422 = vmatprep.subr.bf16.mxu0 0
  %423 = vmatpush1.bf16.xpose.msra.mxu0 %v415
  %424 = vmatprep.subr.bf16.mxu0 0
  %425 = vmatpush1.bf16.xpose.msra.mxu0 %v412
  %426 = vmatprep.subr.bf16.mxu0 0
  %427 = vmatpush1.bf16.xpose.msra.mxu0 %v409
  %428 = vmatprep.subr.bf16.mxu0 0
  %429 = vmatpush1.bf16.xpose.msra.mxu0 %v406
  %430 = vmatprep.subr.bf16.mxu0 0
  %431 = vmatpush1.bf16.xpose.msra.mxu0 %v403
  %432 = vmatprep.subr.bf16.mxu0 0
  %433 = vmatpush1.bf16.xpose.msra.mxu0 %v400
  %434 = vmatprep.subr.bf16.mxu0 0
  %435 = vmatpush1.bf16.xpose.msra.mxu0 %v397
  %436 = vmatprep.subr.bf16.mxu0 0
  %437 = vmatpush2.bf16.xpose.msra.mxu0 0
  %438 = vmatprep.subr.bf16.mxu0 0
  %439 = vmatpush2.bf16.xpose.msra.mxu0 0
  %440 = vmatprep.subr.bf16.mxu0 0
  %441 = vmatpush2.bf16.xpose.msra.mxu0 0
  %442 = vmatprep.subr.bf16.mxu0 0
  %443 = vmatpush2.bf16.xpose.msra.mxu0 0
  %444 = vmatprep.subr.bf16.mxu0 0
  %445 = vmatpush2.bf16.xpose.msra.mxu0 0
  %446 = vmatprep.subr.bf16.mxu0 0
  %447 = vmatpush2.bf16.xpose.msra.mxu0 0
  %448 = vmatprep.subr.bf16.mxu0 0
  %449 = vmatpush2.bf16.xpose.msra.mxu0 0
  %450 = vmatprep.subr.bf16.mxu0 0
  %451 = vmatpush2.bf16.xpose.msra.mxu0 0
  %452 = vmatprep.mubr.bf16.mxu0 0
  %453 = vmatmul.mubr.bf16.gmra.mxu0 %v373
  %v454 = vpop.f32.mrf.mxu0
  %v455 = vadd.f32 0.0, %v454
  %v456 = vpop.f32.mrf.mxu0
  %v457 = vpop.f32.mrf.mxu0
  %v458 = vadd.f32 0.0, %v457
  %v459 = vpop.f32.mrf.mxu0
  %460 = vmatprep.mubr.bf16.mxu0 0
  %461 = vmatmul.mubr.bf16.gmra.mxu0 %v376
  %v462 = vpop.f32.mrf.mxu0
  %v463 = vadd.f32 0.0, %v462
  %v464 = vpop.f32.mrf.mxu0
  %v465 = vpop.f32.mrf.mxu0
  %v466 = vadd.f32 0.0, %v465
  %v467 = vpop.f32.mrf.mxu0
  %468 = vmatprep.mubr.bf16.mxu0 0
  %469 = vmatmul.mubr.bf16.gmra.mxu0 %v379
  %v470 = vpop.f32.mrf.mxu0
  %v471 = vadd.f32 0.0, %v470
  %v472 = vpop.f32.mrf.mxu0
  %v473 = vpop.f32.mrf.mxu0
  %v474 = vadd.f32 0.0, %v473
  %v475 = vpop.f32.mrf.mxu0
  %476 = vmatprep.mubr.bf16.mxu0 0
  %477 = vmatmul.mubr.bf16.gmra.mxu0 %v382
  %v478 = vpop.f32.mrf.mxu0
  %v479 = vadd.f32 0.0, %v478
  %v480 = vpop.f32.mrf.mxu0
  %v481 = vpop.f32.mrf.mxu0
  %v482 = vadd.f32 0.0, %v481
  %v483 = vpop.f32.mrf.mxu0
  %484 = vmatprep.mubr.bf16.mxu0 0
  %485 = vmatmul.mubr.bf16.gmra.mxu0 %v385
  %v486 = vpop.f32.mrf.mxu0
  %v487 = vadd.f32 0.0, %v486
  %v488 = vpop.f32.mrf.mxu0
  %v489 = vpop.f32.mrf.mxu0
  %v490 = vadd.f32 0.0, %v489
  %v491 = vpop.f32.mrf.mxu0
  %492 = vmatprep.mubr.bf16.mxu0 0
  %493 = vmatmul.mubr.bf16.gmra.mxu0 %v388
  %v494 = vpop.f32.mrf.mxu0
  %v495 = vadd.f32 0.0, %v494
  %v496 = vpop.f32.mrf.mxu0
  %v497 = vpop.f32.mrf.mxu0
  %v498 = vadd.f32 0.0, %v497
  %v499 = vpop.f32.mrf.mxu0
  %500 = vmatprep.mubr.bf16.mxu0 0
  %501 = vmatmul.mubr.bf16.gmra.mxu0 %v391
  %v502 = vpop.f32.mrf.mxu0
  %v503 = vadd.f32 0.0, %v502
  %v504 = vpop.f32.mrf.mxu0
  %v505 = vpop.f32.mrf.mxu0
  %v506 = vadd.f32 0.0, %v505
  %v507 = vpop.f32.mrf.mxu0
  %508 = vmatprep.mubr.bf16.mxu0 0
  %509 = vmatmul.mubr.bf16.gmra.mxu0 %v394
  %v510 = vpop.f32.mrf.mxu0
  %v511 = vadd.f32 0.0, %v510
  %v512 = vpop.f32.mrf.mxu0
  %v513 = vpop.f32.mrf.mxu0
  %v514 = vadd.f32 0.0, %v513
  %v515 = vpop.f32.mrf.mxu0
  %516 = vdwg.mxu0
  %v517 = vmul.f32 %v455, 0.125
  %v518 = vmul.f32 %v458, 0.125
  %v519 = vmul.f32 %v463, 0.125
  %v520 = vmul.f32 %v466, 0.125
  %v521 = vmul.f32 %v471, 0.125
  %v522 = vmul.f32 %v474, 0.125
  %v523 = vmul.f32 %v479, 0.125
  %v524 = vmul.f32 %v482, 0.125
  %v525 = vmul.f32 %v487, 0.125
  %v526 = vmul.f32 %v490, 0.125
  %v527 = vmul.f32 %v495, 0.125
  %v528 = vmul.f32 %v498, 0.125
  %v529 = vmul.f32 %v503, 0.125
  %v530 = vmul.f32 %v506, 0.125
  %v531 = vmul.f32 %v511, 0.125
  %v532 = vmul.f32 %v514, 0.125
  %v533 = vld [vmem:[%s3] sm:$0xff]
  %v534 = vld [vmem:[%s3 + $0x8] sm:$0xff]
  %v535 = vld [vmem:[%s3 + $0x10] sm:$0xff]
  %v536 = vld [vmem:[%s3 + $0x18] sm:$0xff]
  %v537 = vld [vmem:[%s3 + $0x20] sm:$0xff]
  %v538 = vld [vmem:[%s3 + $0x28] sm:$0xff]
  %v539 = vld [vmem:[%s3 + $0x30] sm:$0xff]
  %v540 = vld [vmem:[%s3 + $0x38] sm:$0xff]
  %v541 = vld [vmem:[%s3 + $0x40] sm:$0xff]
  %v542 = vld [vmem:[%s3 + $0x48] sm:$0xff]
  %v543 = vld [vmem:[%s3 + $0x50] sm:$0xff]
  %v544 = vld [vmem:[%s3 + $0x58] sm:$0xff]
  %v545 = vld [vmem:[%s3 + $0x60] sm:$0xff]
  %v546 = vld [vmem:[%s3 + $0x68] sm:$0xff]
  %v547 = vld [vmem:[%s3 + $0x70] sm:$0xff]
  %v548 = vld [vmem:[%s3 + $0x78] sm:$0xff]
  %v549 = vadd.f32 %v517, %v533
  %v550 = vadd.f32 %v518, %v534
  %v551 = vadd.f32 %v519, %v535
  %v552 = vadd.f32 %v520, %v536
  %v553 = vadd.f32 %v521, %v537
  %v554 = vadd.f32 %v522, %v538
  %v555 = vadd.f32 %v523, %v539
  %v556 = vadd.f32 %v524, %v540
  %v557 = vadd.f32 %v525, %v541
  %v558 = vadd.f32 %v526, %v542
  %v559 = vadd.f32 %v527, %v543
  %v560 = vadd.f32 %v528, %v544
  %v561 = vadd.f32 %v529, %v545
  %v562 = vadd.f32 %v530, %v546
  %v563 = vadd.f32 %v531, %v547
  %v564 = vadd.f32 %v532, %v548
  %565 = vmax.xlane.f32.xlu0 %v549
  %v566 = vpop.xlane.xlu0 %565
  %567 = vmax.xlane.f32.xlu0 %v550
  %v568 = vpop.xlane.xlu0 %567
  %569 = vmax.xlane.f32.xlu0 %v551
  %v570 = vpop.xlane.xlu0 %569
  %571 = vmax.xlane.f32.xlu0 %v552
  %v572 = vpop.xlane.xlu0 %571
  %573 = vmax.xlane.f32.xlu0 %v553
  %v574 = vpop.xlane.xlu0 %573
  %575 = vmax.xlane.f32.xlu0 %v554
  %v576 = vpop.xlane.xlu0 %575
  %577 = vmax.xlane.f32.xlu0 %v555
  %v578 = vpop.xlane.xlu0 %577
  %579 = vmax.xlane.f32.xlu0 %v556
  %v580 = vpop.xlane.xlu0 %579
  %581 = vmax.xlane.f32.xlu0 %v557
  %v582 = vpop.xlane.xlu0 %581
  %583 = vmax.xlane.f32.xlu0 %v558
  %v584 = vpop.xlane.xlu0 %583
  %585 = vmax.xlane.f32.xlu0 %v559
  %v586 = vpop.xlane.xlu0 %585
  %587 = vmax.xlane.f32.xlu0 %v560
  %v588 = vpop.xlane.xlu0 %587
  %589 = vmax.xlane.f32.xlu0 %v561
  %v590 = vpop.xlane.xlu0 %589
  %591 = vmax.xlane.f32.xlu0 %v562
  %v592 = vpop.xlane.xlu0 %591
  %593 = vmax.xlane.f32.xlu0 %v563
  %v594 = vpop.xlane.xlu0 %593
  %595 = vmax.xlane.f32.xlu0 %v564
  %v596 = vpop.xlane.xlu0 %595
  %v597 = vsub.f32 %v549, %v566
  %v598 = vsub.f32 %v550, %v568
  %v599 = vsub.f32 %v551, %v570
  %v600 = vsub.f32 %v552, %v572
  %v601 = vsub.f32 %v553, %v574
  %v602 = vsub.f32 %v554, %v576
  %v603 = vsub.f32 %v555, %v578
  %v604 = vsub.f32 %v556, %v580
  %v605 = vsub.f32 %v557, %v582
  %v606 = vsub.f32 %v558, %v584
  %v607 = vsub.f32 %v559, %v586
  %v608 = vsub.f32 %v560, %v588
  %v609 = vsub.f32 %v561, %v590
  %v610 = vsub.f32 %v562, %v592
  %v611 = vsub.f32 %v563, %v594
  %v612 = vsub.f32 %v564, %v596
  %v613 = vmul.f32 %v597, 1.442695
  %v614 = vpow.pop %v613
  %v615 = vmul.f32 %v598, 1.442695
  %v616 = vpow.pop %v615
  %v617 = vmul.f32 %v599, 1.442695
  %v618 = vpow.pop %v617
  %v619 = vmul.f32 %v600, 1.442695
  %v620 = vpow.pop %v619
  %v621 = vmul.f32 %v601, 1.442695
  %v622 = vpow.pop %v621
  %v623 = vmul.f32 %v602, 1.442695
  %v624 = vpow.pop %v623
  %v625 = vmul.f32 %v603, 1.442695
  %v626 = vpow.pop %v625
  %v627 = vmul.f32 %v604, 1.442695
  %v628 = vpow.pop %v627
  %v629 = vmul.f32 %v605, 1.442695
  %v630 = vpow.pop %v629
  %v631 = vmul.f32 %v606, 1.442695
  %v632 = vpow.pop %v631
  %v633 = vmul.f32 %v607, 1.442695
  %v634 = vpow.pop %v633
  %v635 = vmul.f32 %v608, 1.442695
  %v636 = vpow.pop %v635
  %v637 = vmul.f32 %v609, 1.442695
  %v638 = vpow.pop %v637
  %v639 = vmul.f32 %v610, 1.442695
  %v640 = vpow.pop %v639
  %v641 = vmul.f32 %v611, 1.442695
  %v642 = vpow.pop %v641
  %v643 = vmul.f32 %v612, 1.442695
  %v644 = vpow.pop %v643
  %645 = vadd.xlane.f32.xlu0 %v614
  %v646 = vpop.xlane.xlu0 %645
  %647 = vadd.xlane.f32.xlu0 %v616
  %v648 = vpop.xlane.xlu0 %647
  %649 = vadd.xlane.f32.xlu0 %v618
  %v650 = vpop.xlane.xlu0 %649
  %651 = vadd.xlane.f32.xlu0 %v620
  %v652 = vpop.xlane.xlu0 %651
  %653 = vadd.xlane.f32.xlu0 %v622
  %v654 = vpop.xlane.xlu0 %653
  %655 = vadd.xlane.f32.xlu0 %v624
  %v656 = vpop.xlane.xlu0 %655
  %657 = vadd.xlane.f32.xlu0 %v626
  %v658 = vpop.xlane.xlu0 %657
  %659 = vadd.xlane.f32.xlu0 %v628
  %v660 = vpop.xlane.xlu0 %659
  %661 = vadd.xlane.f32.xlu0 %v630
  %v662 = vpop.xlane.xlu0 %661
  %663 = vadd.xlane.f32.xlu0 %v632
  %v664 = vpop.xlane.xlu0 %663
  %665 = vadd.xlane.f32.xlu0 %v634
  %v666 = vpop.xlane.xlu0 %665
  %667 = vadd.xlane.f32.xlu0 %v636
  %v668 = vpop.xlane.xlu0 %667
  %669 = vadd.xlane.f32.xlu0 %v638
  %v670 = vpop.xlane.xlu0 %669
  %671 = vadd.xlane.f32.xlu0 %v640
  %v672 = vpop.xlane.xlu0 %671
  %673 = vadd.xlane.f32.xlu0 %v642
  %v674 = vpop.xlane.xlu0 %673
  %675 = vadd.xlane.f32.xlu0 %v644
  %v676 = vpop.xlane.xlu0 %675
  %v677 = vrcp.pop %v646
  %v678 = vrcp.pop %v648
  %v679 = vrcp.pop %v650
  %v680 = vrcp.pop %v652
  %v681 = vrcp.pop %v654
  %v682 = vrcp.pop %v656
  %v683 = vrcp.pop %v658
  %v684 = vrcp.pop %v660
  %v685 = vrcp.pop %v662
  %v686 = vrcp.pop %v664
  %v687 = vrcp.pop %v666
  %v688 = vrcp.pop %v668
  %v689 = vrcp.pop %v670
  %v690 = vrcp.pop %v672
  %v691 = vrcp.pop %v674
  %v692 = vrcp.pop %v676
  %v693 = vmul.f32 %v614, %v677
  %v694 = vmul.f32 %v616, %v678
  %v695 = vmul.f32 %v618, %v679
  %v696 = vmul.f32 %v620, %v680
  %v697 = vmul.f32 %v622, %v681
  %v698 = vmul.f32 %v624, %v682
  %v699 = vmul.f32 %v626, %v683
  %v700 = vmul.f32 %v628, %v684
  %v701 = vmul.f32 %v630, %v685
  %v702 = vmul.f32 %v632, %v686
  %v703 = vmul.f32 %v634, %v687
  %v704 = vmul.f32 %v636, %v688
  %v705 = vmul.f32 %v638, %v689
  %v706 = vmul.f32 %v640, %v690
  %v707 = vmul.f32 %v642, %v691
  %v708 = vmul.f32 %v644, %v692
  %v709 = vpack.c.bf16 %v694, %v693
  %v710 = vpack.c.bf16 %v696, %v695
  %v711 = vpack.c.bf16 %v698, %v697
  %v712 = vpack.c.bf16 %v700, %v699
  %v713 = vpack.c.bf16 %v702, %v701
  %v714 = vpack.c.bf16 %v704, %v703
  %v715 = vpack.c.bf16 %v706, %v705
  %v716 = vpack.c.bf16 %v708, %v707
  %717 = vmatprep.subr.bf16.mxu0 0
  %718 = vmatpush1.bf16.msra.mxu0 %v298
  %719 = vmatprep.subr.bf16.mxu0 0
  %720 = vmatpush1.bf16.msra.mxu0 %v297
  %721 = vmatprep.subr.bf16.mxu0 0
  %722 = vmatpush1.bf16.msra.mxu0 %v296
  %723 = vmatprep.subr.bf16.mxu0 0
  %724 = vmatpush1.bf16.msra.mxu0 %v295
  %725 = vmatprep.subr.bf16.mxu0 0
  %726 = vmatpush1.bf16.msra.mxu0 %v294
  %727 = vmatprep.subr.bf16.mxu0 0
  %728 = vmatpush1.bf16.msra.mxu0 %v293
  %729 = vmatprep.subr.bf16.mxu0 0
  %730 = vmatpush1.bf16.msra.mxu0 %v292
  %731 = vmatprep.subr.bf16.mxu0 0
  %732 = vmatpush1.bf16.msra.mxu0 %v291
  %733 = vmatprep.subr.bf16.mxu0 0
  %734 = vmatpush2.bf16.msra.mxu0 0
  %735 = vmatprep.subr.bf16.mxu0 0
  %736 = vmatpush2.bf16.msra.mxu0 0
  %737 = vmatprep.subr.bf16.mxu0 0
  %738 = vmatpush2.bf16.msra.mxu0 0
  %739 = vmatprep.subr.bf16.mxu0 0
  %740 = vmatpush2.bf16.msra.mxu0 0
  %741 = vmatprep.subr.bf16.mxu0 0
  %742 = vmatpush2.bf16.msra.mxu0 0
  %743 = vmatprep.subr.bf16.mxu0 0
  %744 = vmatpush2.bf16.msra.mxu0 0
  %745 = vmatprep.subr.bf16.mxu0 0
  %746 = vmatpush2.bf16.msra.mxu0 0
  %747 = vmatprep.subr.bf16.mxu0 0
  %748 = vmatpush2.bf16.msra.mxu0 0
  %749 = vmatprep.mubr.bf16.mxu0 0
  %750 = vmatmul.mubr.bf16.gmra.mxu0 %v709
  %v751 = vpop.f32.mrf.mxu0
  %v752 = vadd.f32 0.0, %v751
  %v753 = vpop.f32.mrf.mxu0
  %v754 = vpop.f32.mrf.mxu0
  %v755 = vadd.f32 0.0, %v754
  %v756 = vpop.f32.mrf.mxu0
  %757 = vmatprep.mubr.bf16.mxu0 0
  %758 = vmatmul.mubr.bf16.gmra.mxu0 %v710
  %v759 = vpop.f32.mrf.mxu0
  %v760 = vadd.f32 0.0, %v759
  %v761 = vpop.f32.mrf.mxu0
  %v762 = vpop.f32.mrf.mxu0
  %v763 = vadd.f32 0.0, %v762
  %v764 = vpop.f32.mrf.mxu0
  %765 = vmatprep.mubr.bf16.mxu0 0
  %766 = vmatmul.mubr.bf16.gmra.mxu0 %v711
  %v767 = vpop.f32.mrf.mxu0
  %v768 = vadd.f32 0.0, %v767
  %v769 = vpop.f32.mrf.mxu0
  %v770 = vpop.f32.mrf.mxu0
  %v771 = vadd.f32 0.0, %v770
  %v772 = vpop.f32.mrf.mxu0
  %773 = vmatprep.mubr.bf16.mxu0 0
  %774 = vmatmul.mubr.bf16.gmra.mxu0 %v712
  %v775 = vpop.f32.mrf.mxu0
  %v776 = vadd.f32 0.0, %v775
  %v777 = vpop.f32.mrf.mxu0
  %v778 = vpop.f32.mrf.mxu0
  %v779 = vadd.f32 0.0, %v778
  %v780 = vpop.f32.mrf.mxu0
  %781 = vmatprep.mubr.bf16.mxu0 0
  %782 = vmatmul.mubr.bf16.gmra.mxu0 %v713
  %v783 = vpop.f32.mrf.mxu0
  %v784 = vadd.f32 0.0, %v783
  %v785 = vpop.f32.mrf.mxu0
  %v786 = vpop.f32.mrf.mxu0
  %v787 = vadd.f32 0.0, %v786
  %v788 = vpop.f32.mrf.mxu0
  %789 = vmatprep.mubr.bf16.mxu0 0
  %790 = vmatmul.mubr.bf16.gmra.mxu0 %v714
  %v791 = vpop.f32.mrf.mxu0
  %v792 = vadd.f32 0.0, %v791
  %v793 = vpop.f32.mrf.mxu0
  %v794 = vpop.f32.mrf.mxu0
  %v795 = vadd.f32 0.0, %v794
  %v796 = vpop.f32.mrf.mxu0
  %797 = vmatprep.mubr.bf16.mxu0 0
  %798 = vmatmul.mubr.bf16.gmra.mxu0 %v715
  %v799 = vpop.f32.mrf.mxu0
  %v800 = vadd.f32 0.0, %v799
  %v801 = vpop.f32.mrf.mxu0
  %v802 = vpop.f32.mrf.mxu0
  %v803 = vadd.f32 0.0, %v802
  %v804 = vpop.f32.mrf.mxu0
  %805 = vmatprep.mubr.bf16.mxu0 0
  %806 = vmatmul.mubr.bf16.gmra.mxu0 %v716
  %v807 = vpop.f32.mrf.mxu0
  %v808 = vadd.f32 0.0, %v807
  %v809 = vpop.f32.mrf.mxu0
  %v810 = vpop.f32.mrf.mxu0
  %v811 = vadd.f32 0.0, %v810
  %v812 = vpop.f32.mrf.mxu0
  %813 = vdwg.mxu0
  %v814 = vadd.f32 %v315, %v752
  %v815 = vadd.f32 %v316, %v755
  %v816 = vadd.f32 %v317, %v760
  %v817 = vadd.f32 %v318, %v763
  %v818 = vadd.f32 %v319, %v768
  %v819 = vadd.f32 %v320, %v771
  %v820 = vadd.f32 %v321, %v776
  %v821 = vadd.f32 %v322, %v779
  %v822 = vadd.f32 %v323, %v784
  %v823 = vadd.f32 %v324, %v787
  %v824 = vadd.f32 %v325, %v792
  %v825 = vadd.f32 %v326, %v795
  %v826 = vadd.f32 %v327, %v800
  %v827 = vadd.f32 %v328, %v803
  %v828 = vadd.f32 %v329, %v808
  %v829 = vadd.f32 %v330, %v811
  %v830 = vpack.c.bf16 %v815, %v814
  %v831 = vpack.c.bf16 %v817, %v816
  %v832 = vpack.c.bf16 %v819, %v818
  %v833 = vpack.c.bf16 %v821, %v820
  %v834 = vpack.c.bf16 %v823, %v822
  %v835 = vpack.c.bf16 %v825, %v824
  %v836 = vpack.c.bf16 %v827, %v826
  %v837 = vpack.c.bf16 %v829, %v828
  %v838 = vld [vmem:[%s6] sm:$0xf]
  %v839 = vld [vmem:[%s6 + $0x4] sm:$0xf]
  %v840 = vld [vmem:[%s6 + $0x8] sm:$0xf]
  %v841 = vld [vmem:[%s6 + $0xc] sm:$0xf]
  %v842 = vld [vmem:[%s6 + $0x10] sm:$0xf]
  %v843 = vld [vmem:[%s6 + $0x14] sm:$0xf]
  %v844 = vld [vmem:[%s6 + $0x18] sm:$0xf]
  %v845 = vld [vmem:[%s6 + $0x1c] sm:$0xf]
  %v846 = vld [vmem:[%s7] sm:$0x1]
  %v848 = vlaneseq
  %v849 = vshrl.u32 %v848, 7
  %v850 = vsub.s32 0, %v849
  %v851 = vrot.slane %v846, %v850
  %v861 = vunpack.c.l.b16 %v838
  %v862 = vunpack.c.l.b16 %v839
  %v863 = vunpack.c.l.b16 %v840
  %v864 = vunpack.c.l.b16 %v841
  %v865 = vunpack.c.l.b16 %v842
  %v866 = vunpack.c.l.b16 %v843
  %v867 = vunpack.c.l.b16 %v844
  %v868 = vunpack.c.l.b16 %v845
  %v869 = vpack.c.b16 %v862, %v861
  %v870 = vpack.c.b16 %v864, %v863
  %v871 = vpack.c.b16 %v866, %v865
  %v872 = vpack.c.b16 %v868, %v867
  %v878 = vsel %vm371, %v830, 0
  %v881 = vsel %vm371, %v831, 0
  %v884 = vsel %vm371, %v832, 0
  %v887 = vsel %vm371, %v833, 0
  %v890 = vsel %vm371, %v834, 0
  %v893 = vsel %vm371, %v835, 0
  %v896 = vsel %vm371, %v836, 0
  %v899 = vsel %vm371, %v837, 0
  %901 = vmatprep.subr.bf16.mxu0 0
  %902 = vmatpush1.bf16.msra.mxu0 0
  %903 = vmatprep.subr.bf16.mxu0 0
  %904 = vmatpush1.bf16.msra.mxu0 0
  %905 = vmatprep.subr.bf16.mxu0 0
  %906 = vmatpush1.bf16.msra.mxu0 0
  %907 = vmatprep.subr.bf16.mxu0 0
  %908 = vmatpush1.bf16.msra.mxu0 0
  %909 = vmatprep.subr.bf16.mxu0 0
  %910 = vmatpush1.bf16.msra.mxu0 %v872
  %911 = vmatprep.subr.bf16.mxu0 0
  %912 = vmatpush1.bf16.msra.mxu0 %v871
  %913 = vmatprep.subr.bf16.mxu0 0
  %914 = vmatpush1.bf16.msra.mxu0 %v870
  %915 = vmatprep.subr.bf16.mxu0 0
  %916 = vmatpush1.bf16.msra.mxu0 %v869
  %917 = vmatprep.subr.bf16.mxu0 0
  %918 = vmatpush2.bf16.msra.mxu0 0
  %919 = vmatprep.subr.bf16.mxu0 0
  %920 = vmatpush2.bf16.msra.mxu0 0
  %921 = vmatprep.subr.bf16.mxu0 0
  %922 = vmatpush2.bf16.msra.mxu0 0
  %923 = vmatprep.subr.bf16.mxu0 0
  %924 = vmatpush2.bf16.msra.mxu0 0
  %925 = vmatprep.subr.bf16.mxu0 0
  %926 = vmatpush2.bf16.msra.mxu0 0
  %927 = vmatprep.subr.bf16.mxu0 0
  %928 = vmatpush2.bf16.msra.mxu0 0
  %929 = vmatprep.subr.bf16.mxu0 0
  %930 = vmatpush2.bf16.msra.mxu0 0
  %931 = vmatprep.subr.bf16.mxu0 0
  %932 = vmatpush2.bf16.msra.mxu0 0
  %933 = vmatprep.mubr.bf16.mxu0 0
  %934 = vmatmul.mubr.bf16.gmra.mxu0 %v878
  %v935 = vpop.f32.mrf.mxu0
  %v936 = vadd.f32 %v851, %v935
  %v937 = vpop.f32.mrf.mxu0
  %v938 = vpop.f32.mrf.mxu0
  %v939 = vadd.f32 %v851, %v938
  %v940 = vpop.f32.mrf.mxu0
  %941 = vmatprep.mubr.bf16.mxu0 0
  %942 = vmatmul.mubr.bf16.gmra.mxu0 %v881
  %v943 = vpop.f32.mrf.mxu0
  %v944 = vadd.f32 %v851, %v943
  %v945 = vpop.f32.mrf.mxu0
  %v946 = vpop.f32.mrf.mxu0
  %v947 = vadd.f32 %v851, %v946
  %v948 = vpop.f32.mrf.mxu0
  %949 = vmatprep.mubr.bf16.mxu0 0
  %950 = vmatmul.mubr.bf16.gmra.mxu0 %v884
  %v951 = vpop.f32.mrf.mxu0
  %v952 = vadd.f32 %v851, %v951
  %v953 = vpop.f32.mrf.mxu0
  %v954 = vpop.f32.mrf.mxu0
  %v955 = vadd.f32 %v851, %v954
  %v956 = vpop.f32.mrf.mxu0
  %957 = vmatprep.mubr.bf16.mxu0 0
  %958 = vmatmul.mubr.bf16.gmra.mxu0 %v887
  %v959 = vpop.f32.mrf.mxu0
  %v960 = vadd.f32 %v851, %v959
  %v961 = vpop.f32.mrf.mxu0
  %v962 = vpop.f32.mrf.mxu0
  %v963 = vadd.f32 %v851, %v962
  %v964 = vpop.f32.mrf.mxu0
  %965 = vmatprep.mubr.bf16.mxu0 0
  %966 = vmatmul.mubr.bf16.gmra.mxu0 %v890
  %v967 = vpop.f32.mrf.mxu0
  %v968 = vadd.f32 %v851, %v967
  %v969 = vpop.f32.mrf.mxu0
  %v970 = vpop.f32.mrf.mxu0
  %v971 = vadd.f32 %v851, %v970
  %v972 = vpop.f32.mrf.mxu0
  %973 = vmatprep.mubr.bf16.mxu0 0
  %974 = vmatmul.mubr.bf16.gmra.mxu0 %v893
  %v975 = vpop.f32.mrf.mxu0
  %v976 = vadd.f32 %v851, %v975
  %v977 = vpop.f32.mrf.mxu0
  %v978 = vpop.f32.mrf.mxu0
  %v979 = vadd.f32 %v851, %v978
  %v980 = vpop.f32.mrf.mxu0
  %981 = vmatprep.mubr.bf16.mxu0 0
  %982 = vmatmul.mubr.bf16.gmra.mxu0 %v896
  %v983 = vpop.f32.mrf.mxu0
  %v984 = vadd.f32 %v851, %v983
  %v985 = vpop.f32.mrf.mxu0
  %v986 = vpop.f32.mrf.mxu0
  %v987 = vadd.f32 %v851, %v986
  %v988 = vpop.f32.mrf.mxu0
  %989 = vmatprep.mubr.bf16.mxu0 0
  %990 = vmatmul.mubr.bf16.gmra.mxu0 %v899
  %v991 = vpop.f32.mrf.mxu0
  %v992 = vadd.f32 %v851, %v991
  %v993 = vpop.f32.mrf.mxu0
  %v994 = vpop.f32.mrf.mxu0
  %v995 = vadd.f32 %v851, %v994
  %v996 = vpop.f32.mrf.mxu0
  %997 = vdwg.mxu0
  %v998 = vmul.f32 %v936, %v936
  %v999 = vmul.f32 %v939, %v939
  %v1000 = vmul.f32 %v944, %v944
  %v1001 = vmul.f32 %v947, %v947
  %v1002 = vmul.f32 %v952, %v952
  %v1003 = vmul.f32 %v955, %v955
  %v1004 = vmul.f32 %v960, %v960
  %v1005 = vmul.f32 %v963, %v963
  %v1006 = vmul.f32 %v968, %v968
  %v1007 = vmul.f32 %v971, %v971
  %v1008 = vmul.f32 %v976, %v976
  %v1009 = vmul.f32 %v979, %v979
  %v1010 = vmul.f32 %v984, %v984
  %v1011 = vmul.f32 %v987, %v987
  %v1012 = vmul.f32 %v992, %v992
  %v1013 = vmul.f32 %v995, %v995
  %v1014 = vmul.f32 %v936, %v998
  %v1015 = vmul.f32 %v939, %v999
  %v1016 = vmul.f32 %v944, %v1000
  %v1017 = vmul.f32 %v947, %v1001
  %v1018 = vmul.f32 %v952, %v1002
  %v1019 = vmul.f32 %v955, %v1003
  %v1020 = vmul.f32 %v960, %v1004
  %v1021 = vmul.f32 %v963, %v1005
  %v1022 = vmul.f32 %v968, %v1006
  %v1023 = vmul.f32 %v971, %v1007
  %v1024 = vmul.f32 %v976, %v1008
  %v1025 = vmul.f32 %v979, %v1009
  %v1026 = vmul.f32 %v984, %v1010
  %v1027 = vmul.f32 %v987, %v1011
  %v1028 = vmul.f32 %v992, %v1012
  %v1029 = vmul.f32 %v995, %v1013
  %v1030 = vmul.f32 %v1014, 0.044715
  %v1031 = vmul.f32 %v1015, 0.044715
  %v1032 = vmul.f32 %v1016, 0.044715
  %v1033 = vmul.f32 %v1017, 0.044715
  %v1034 = vmul.f32 %v1018, 0.044715
  %v1035 = vmul.f32 %v1019, 0.044715
  %v1036 = vmul.f32 %v1020, 0.044715
  %v1037 = vmul.f32 %v1021, 0.044715
  %v1038 = vmul.f32 %v1022, 0.044715
  %v1039 = vmul.f32 %v1023, 0.044715
  %v1040 = vmul.f32 %v1024, 0.044715
  %v1041 = vmul.f32 %v1025, 0.044715
  %v1042 = vmul.f32 %v1026, 0.044715
  %v1043 = vmul.f32 %v1027, 0.044715
  %v1044 = vmul.f32 %v1028, 0.044715
  %v1045 = vmul.f32 %v1029, 0.044715
  %v1046 = vadd.f32 %v936, %v1030
  %v1047 = vadd.f32 %v939, %v1031
  %v1048 = vadd.f32 %v944, %v1032
  %v1049 = vadd.f32 %v947, %v1033
  %v1050 = vadd.f32 %v952, %v1034
  %v1051 = vadd.f32 %v955, %v1035
  %v1052 = vadd.f32 %v960, %v1036
  %v1053 = vadd.f32 %v963, %v1037
  %v1054 = vadd.f32 %v968, %v1038
  %v1055 = vadd.f32 %v971, %v1039
  %v1056 = vadd.f32 %v976, %v1040
  %v1057 = vadd.f32 %v979, %v1041
  %v1058 = vadd.f32 %v984, %v1042
  %v1059 = vadd.f32 %v987, %v1043
  %v1060 = vadd.f32 %v992, %v1044
  %v1061 = vadd.f32 %v995, %v1045
  %v1062 = vmul.f32 %v1046, 0.7978846
  %v1063 = vmul.f32 %v1047, 0.7978846
  %v1064 = vmul.f32 %v1048, 0.7978846
  %v1065 = vmul.f32 %v1049, 0.7978846
  %v1066 = vmul.f32 %v1050, 0.7978846
  %v1067 = vmul.f32 %v1051, 0.7978846
  %v1068 = vmul.f32 %v1052, 0.7978846
  %v1069 = vmul.f32 %v1053, 0.7978846
  %v1070 = vmul.f32 %v1054, 0.7978846
  %v1071 = vmul.f32 %v1055, 0.7978846
  %v1072 = vmul.f32 %v1056, 0.7978846
  %v1073 = vmul.f32 %v1057, 0.7978846
  %v1074 = vmul.f32 %v1058, 0.7978846
  %v1075 = vmul.f32 %v1059, 0.7978846
  %v1076 = vmul.f32 %v1060, 0.7978846
  %v1077 = vmul.f32 %v1061, 0.7978846
  %v1078 = vtanh.pop %v1062
  %v1079 = vtanh.pop %v1063
  %v1080 = vtanh.pop %v1064
  %v1081 = vtanh.pop %v1065
  %v1082 = vtanh.pop %v1066
  %v1083 = vtanh.pop %v1067
  %v1084 = vtanh.pop %v1068
  %v1085 = vtanh.pop %v1069
  %v1086 = vtanh.pop %v1070
  %v1087 = vtanh.pop %v1071
  %v1088 = vtanh.pop %v1072
  %v1089 = vtanh.pop %v1073
  %v1090 = vtanh.pop %v1074
  %v1091 = vtanh.pop %v1075
  %v1092 = vtanh.pop %v1076
  %v1093 = vtanh.pop %v1077
  %v1094 = vadd.f32 %v1078, 1.0
  %v1095 = vadd.f32 %v1079, 1.0
  %v1096 = vadd.f32 %v1080, 1.0
  %v1097 = vadd.f32 %v1081, 1.0
  %v1098 = vadd.f32 %v1082, 1.0
  %v1099 = vadd.f32 %v1083, 1.0
  %v1100 = vadd.f32 %v1084, 1.0
  %v1101 = vadd.f32 %v1085, 1.0
  %v1102 = vadd.f32 %v1086, 1.0
  %v1103 = vadd.f32 %v1087, 1.0
  %v1104 = vadd.f32 %v1088, 1.0
  %v1105 = vadd.f32 %v1089, 1.0
  %v1106 = vadd.f32 %v1090, 1.0
  %v1107 = vadd.f32 %v1091, 1.0
  %v1108 = vadd.f32 %v1092, 1.0
  %v1109 = vadd.f32 %v1093, 1.0
  %v1110 = vmul.f32 %v1094, 0.5
  %v1111 = vmul.f32 %v1095, 0.5
  %v1112 = vmul.f32 %v1096, 0.5
  %v1113 = vmul.f32 %v1097, 0.5
  %v1114 = vmul.f32 %v1098, 0.5
  %v1115 = vmul.f32 %v1099, 0.5
  %v1116 = vmul.f32 %v1100, 0.5
  %v1117 = vmul.f32 %v1101, 0.5
  %v1118 = vmul.f32 %v1102, 0.5
  %v1119 = vmul.f32 %v1103, 0.5
  %v1120 = vmul.f32 %v1104, 0.5
  %v1121 = vmul.f32 %v1105, 0.5
  %v1122 = vmul.f32 %v1106, 0.5
  %v1123 = vmul.f32 %v1107, 0.5
  %v1124 = vmul.f32 %v1108, 0.5
  %v1125 = vmul.f32 %v1109, 0.5
  %v1126 = vmul.f32 %v936, %v1110
  %v1127 = vmul.f32 %v939, %v1111
  %v1128 = vmul.f32 %v944, %v1112
  %v1129 = vmul.f32 %v947, %v1113
  %v1130 = vmul.f32 %v952, %v1114
  %v1131 = vmul.f32 %v955, %v1115
  %v1132 = vmul.f32 %v960, %v1116
  %v1133 = vmul.f32 %v963, %v1117
  %v1134 = vmul.f32 %v968, %v1118
  %v1135 = vmul.f32 %v971, %v1119
  %v1136 = vmul.f32 %v976, %v1120
  %v1137 = vmul.f32 %v979, %v1121
  %v1138 = vmul.f32 %v984, %v1122
  %v1139 = vmul.f32 %v987, %v1123
  %v1140 = vmul.f32 %v992, %v1124
  %v1141 = vmul.f32 %v995, %v1125
  %v1142 = vpack.c.bf16 %v1127, %v1126
  %v1143 = vpack.c.bf16 %v1129, %v1128
  %v1144 = vpack.c.bf16 %v1131, %v1130
  %v1145 = vpack.c.bf16 %v1133, %v1132
  %v1146 = vpack.c.bf16 %v1135, %v1134
  %v1147 = vpack.c.bf16 %v1137, %v1136
  %v1148 = vpack.c.bf16 %v1139, %v1138
  %v1149 = vpack.c.bf16 %v1141, %v1140
  %v1150 = vld [vmem:[%s8] sm:$0xf]
  %v1151 = vld [vmem:[%s8 + $0x4] sm:$0xf]
  %v1152 = vld [vmem:[%s8 + $0x8] sm:$0xf]
  %v1153 = vld [vmem:[%s8 + $0xc] sm:$0xf]
  %v1154 = vld [vmem:[%s8 + $0x10] sm:$0xf]
  %v1155 = vld [vmem:[%s8 + $0x14] sm:$0xf]
  %v1156 = vld [vmem:[%s8 + $0x18] sm:$0xf]
  %v1157 = vld [vmem:[%s8 + $0x1c] sm:$0xf]
  %v1158 = vld [vmem:[%s8 + $0x20] sm:$0xf]
  %v1159 = vld [vmem:[%s8 + $0x24] sm:$0xf]
  %v1160 = vld [vmem:[%s8 + $0x28] sm:$0xf]
  %v1161 = vld [vmem:[%s8 + $0x2c] sm:$0xf]
  %v1162 = vld [vmem:[%s8 + $0x30] sm:$0xf]
  %v1163 = vld [vmem:[%s8 + $0x34] sm:$0xf]
  %v1164 = vld [vmem:[%s8 + $0x38] sm:$0xf]
  %v1165 = vld [vmem:[%s8 + $0x3c] sm:$0xf]
  %v1182 = vunpack.c.l.b16 %v1150
  %v1183 = vunpack.c.l.b16 %v1151
  %v1184 = vunpack.c.l.b16 %v1152
  %v1185 = vunpack.c.l.b16 %v1153
  %v1186 = vunpack.c.l.b16 %v1154
  %v1187 = vunpack.c.l.b16 %v1155
  %v1188 = vunpack.c.l.b16 %v1156
  %v1189 = vunpack.c.l.b16 %v1157
  %v1190 = vunpack.c.l.b16 %v1158
  %v1191 = vunpack.c.l.b16 %v1159
  %v1192 = vunpack.c.l.b16 %v1160
  %v1193 = vunpack.c.l.b16 %v1161
  %v1194 = vunpack.c.l.b16 %v1162
  %v1195 = vunpack.c.l.b16 %v1163
  %v1196 = vunpack.c.l.b16 %v1164
  %v1197 = vunpack.c.l.b16 %v1165
  %v1198 = vpack.c.b16 %v1183, %v1182
  %v1199 = vpack.c.b16 %v1185, %v1184
  %v1200 = vpack.c.b16 %v1187, %v1186
  %v1201 = vpack.c.b16 %v1189, %v1188
  %v1202 = vpack.c.b16 %v1191, %v1190
  %v1203 = vpack.c.b16 %v1193, %v1192
  %v1204 = vpack.c.b16 %v1195, %v1194
  %v1205 = vpack.c.b16 %v1197, %v1196
  %1214 = vmatprep.subr.bf16.mxu0 0
  %1215 = vmatpush1.bf16.msra.mxu0 %v1205
  %1216 = vmatprep.subr.bf16.mxu0 0
  %1217 = vmatpush1.bf16.msra.mxu0 %v1204
  %1218 = vmatprep.subr.bf16.mxu0 0
  %1219 = vmatpush1.bf16.msra.mxu0 %v1203
  %1220 = vmatprep.subr.bf16.mxu0 0
  %1221 = vmatpush1.bf16.msra.mxu0 %v1202
  %1222 = vmatprep.subr.bf16.mxu0 0
  %1223 = vmatpush1.bf16.msra.mxu0 %v1201
  %1224 = vmatprep.subr.bf16.mxu0 0
  %1225 = vmatpush1.bf16.msra.mxu0 %v1200
  %1226 = vmatprep.subr.bf16.mxu0 0
  %1227 = vmatpush1.bf16.msra.mxu0 %v1199
  %1228 = vmatprep.subr.bf16.mxu0 0
  %1229 = vmatpush1.bf16.msra.mxu0 %v1198
  %1230 = vmatprep.subr.bf16.mxu0 0
  %1231 = vmatpush2.bf16.msra.mxu0 0
  %1232 = vmatprep.subr.bf16.mxu0 0
  %1233 = vmatpush2.bf16.msra.mxu0 0
  %1234 = vmatprep.subr.bf16.mxu0 0
  %1235 = vmatpush2.bf16.msra.mxu0 0
  %1236 = vmatprep.subr.bf16.mxu0 0
  %1237 = vmatpush2.bf16.msra.mxu0 0
  %1238 = vmatprep.subr.bf16.mxu0 0
  %1239 = vmatpush2.bf16.msra.mxu0 0
  %1240 = vmatprep.subr.bf16.mxu0 0
  %1241 = vmatpush2.bf16.msra.mxu0 0
  %1242 = vmatprep.subr.bf16.mxu0 0
  %1243 = vmatpush2.bf16.msra.mxu0 0
  %1244 = vmatprep.subr.bf16.mxu0 0
  %1245 = vmatpush2.bf16.msra.mxu0 0
  %1246 = vmatprep.mubr.bf16.mxu0 0
  %1247 = vmatmul.mubr.bf16.gmra.mxu0 %v1142
  %v1248 = vpop.f32.mrf.mxu0
  %v1249 = vadd.f32 0.0, %v1248
  %v1250 = vpop.f32.mrf.mxu0
  %v1251 = vpop.f32.mrf.mxu0
  %v1252 = vadd.f32 0.0, %v1251
  %v1253 = vpop.f32.mrf.mxu0
  %1254 = vmatprep.mubr.bf16.mxu0 0
  %1255 = vmatmul.mubr.bf16.gmra.mxu0 %v1143
  %v1256 = vpop.f32.mrf.mxu0
  %v1257 = vadd.f32 0.0, %v1256
  %v1258 = vpop.f32.mrf.mxu0
  %v1259 = vpop.f32.mrf.mxu0
  %v1260 = vadd.f32 0.0, %v1259
  %v1261 = vpop.f32.mrf.mxu0
  %1262 = vmatprep.mubr.bf16.mxu0 0
  %1263 = vmatmul.mubr.bf16.gmra.mxu0 %v1144
  %v1264 = vpop.f32.mrf.mxu0
  %v1265 = vadd.f32 0.0, %v1264
  %v1266 = vpop.f32.mrf.mxu0
  %v1267 = vpop.f32.mrf.mxu0
  %v1268 = vadd.f32 0.0, %v1267
  %v1269 = vpop.f32.mrf.mxu0
  %1270 = vmatprep.mubr.bf16.mxu0 0
  %1271 = vmatmul.mubr.bf16.gmra.mxu0 %v1145
  %v1272 = vpop.f32.mrf.mxu0
  %v1273 = vadd.f32 0.0, %v1272
  %v1274 = vpop.f32.mrf.mxu0
  %v1275 = vpop.f32.mrf.mxu0
  %v1276 = vadd.f32 0.0, %v1275
  %v1277 = vpop.f32.mrf.mxu0
  %1278 = vmatprep.mubr.bf16.mxu0 0
  %1279 = vmatmul.mubr.bf16.gmra.mxu0 %v1146
  %v1280 = vpop.f32.mrf.mxu0
  %v1281 = vadd.f32 0.0, %v1280
  %v1282 = vpop.f32.mrf.mxu0
  %v1283 = vpop.f32.mrf.mxu0
  %v1284 = vadd.f32 0.0, %v1283
  %v1285 = vpop.f32.mrf.mxu0
  %1286 = vmatprep.mubr.bf16.mxu0 0
  %1287 = vmatmul.mubr.bf16.gmra.mxu0 %v1147
  %v1288 = vpop.f32.mrf.mxu0
  %v1289 = vadd.f32 0.0, %v1288
  %v1290 = vpop.f32.mrf.mxu0
  %v1291 = vpop.f32.mrf.mxu0
  %v1292 = vadd.f32 0.0, %v1291
  %v1293 = vpop.f32.mrf.mxu0
  %1294 = vmatprep.mubr.bf16.mxu0 0
  %1295 = vmatmul.mubr.bf16.gmra.mxu0 %v1148
  %v1296 = vpop.f32.mrf.mxu0
  %v1297 = vadd.f32 0.0, %v1296
  %v1298 = vpop.f32.mrf.mxu0
  %v1299 = vpop.f32.mrf.mxu0
  %v1300 = vadd.f32 0.0, %v1299
  %v1301 = vpop.f32.mrf.mxu0
  %1302 = vmatprep.mubr.bf16.mxu0 0
  %1303 = vmatmul.mubr.bf16.gmra.mxu0 %v1149
  %v1304 = vpop.f32.mrf.mxu0
  %v1305 = vadd.f32 0.0, %v1304
  %v1306 = vpop.f32.mrf.mxu0
  %v1307 = vpop.f32.mrf.mxu0
  %v1308 = vadd.f32 0.0, %v1307
  %v1309 = vpop.f32.mrf.mxu0
  %1310 = vdwg.mxu0
  %v1311 = vadd.f32 %v814, %v1249
  %v1312 = vadd.f32 %v815, %v1252
  %v1313 = vadd.f32 %v816, %v1257
  %v1314 = vadd.f32 %v817, %v1260
  %v1315 = vadd.f32 %v818, %v1265
  %v1316 = vadd.f32 %v819, %v1268
  %v1317 = vadd.f32 %v820, %v1273
  %v1318 = vadd.f32 %v821, %v1276
  %v1319 = vadd.f32 %v822, %v1281
  %v1320 = vadd.f32 %v823, %v1284
  %v1321 = vadd.f32 %v824, %v1289
  %v1322 = vadd.f32 %v825, %v1292
  %v1323 = vadd.f32 %v826, %v1297
  %v1324 = vadd.f32 %v827, %v1300
  %v1325 = vadd.f32 %v828, %v1305
  %v1326 = vadd.f32 %v829, %v1308
  %v1327 = vld [vmem:[%s9] sm:$0x1]
  %v1329 = vlaneseq
  %v1330 = vshrl.u32 %v1329, 7
  %v1331 = vsub.s32 0, %v1330
  %v1332 = vrot.slane %v1327, %v1331
  %v1334 = vadd.f32 %v1311, %v1332
  %v1335 = vadd.f32 %v1312, %v1332
  %v1336 = vadd.f32 %v1313, %v1332
  %v1337 = vadd.f32 %v1314, %v1332
  %v1338 = vadd.f32 %v1315, %v1332
  %v1339 = vadd.f32 %v1316, %v1332
  %v1340 = vadd.f32 %v1317, %v1332
  %v1341 = vadd.f32 %v1318, %v1332
  %v1342 = vadd.f32 %v1319, %v1332
  %v1343 = vadd.f32 %v1320, %v1332
  %v1344 = vadd.f32 %v1321, %v1332
  %v1345 = vadd.f32 %v1322, %v1332
  %v1346 = vadd.f32 %v1323, %v1332
  %v1347 = vadd.f32 %v1324, %v1332
  %v1348 = vadd.f32 %v1325, %v1332
  %v1349 = vadd.f32 %v1326, %v1332
  %v1350 = vpack.c.bf16 %v1335, %v1334
  %v1351 = vpack.c.bf16 %v1337, %v1336
  %v1352 = vpack.c.bf16 %v1339, %v1338
  %v1353 = vpack.c.bf16 %v1341, %v1340
  %v1354 = vpack.c.bf16 %v1343, %v1342
  %v1355 = vpack.c.bf16 %v1345, %v1344
  %v1356 = vpack.c.bf16 %v1347, %v1346
  %v1357 = vpack.c.bf16 %v1349, %v1348
  %v1358 = vld [vmem:[%s10] sm:$0xf]
  %v1359 = vld [vmem:[%s10 + $0x4] sm:$0xf]
  %v1360 = vld [vmem:[%s10 + $0x8] sm:$0xf]
  %v1361 = vld [vmem:[%s10 + $0xc] sm:$0xf]
  %v1362 = vld [vmem:[%s10 + $0x10] sm:$0xf]
  %v1363 = vld [vmem:[%s10 + $0x14] sm:$0xf]
  %v1364 = vld [vmem:[%s10 + $0x18] sm:$0xf]
  %v1365 = vld [vmem:[%s10 + $0x1c] sm:$0xf]
  %v1366 = vld [vmem:[%s11] sm:$0x1]
  %v1368 = vlaneseq
  %v1369 = vshrl.u32 %v1368, 7
  %v1370 = vsub.s32 0, %v1369
  %v1371 = vrot.slane %v1366, %v1370
  %v1381 = vunpack.c.l.b16 %v1358
  %v1382 = vunpack.c.l.b16 %v1359
  %v1383 = vunpack.c.l.b16 %v1360
  %v1384 = vunpack.c.l.b16 %v1361
  %v1385 = vunpack.c.l.b16 %v1362
  %v1386 = vunpack.c.l.b16 %v1363
  %v1387 = vunpack.c.l.b16 %v1364
  %v1388 = vunpack.c.l.b16 %v1365
  %v1389 = vpack.c.b16 %v1382, %v1381
  %v1390 = vpack.c.b16 %v1384, %v1383
  %v1391 = vpack.c.b16 %v1386, %v1385
  %v1392 = vpack.c.b16 %v1388, %v1387
  %v1398 = vsel %vm371, %v1350, 0
  %v1401 = vsel %vm371, %v1351, 0
  %v1404 = vsel %vm371, %v1352, 0
  %v1407 = vsel %vm371, %v1353, 0
  %v1410 = vsel %vm371, %v1354, 0
  %v1413 = vsel %vm371, %v1355, 0
  %v1416 = vsel %vm371, %v1356, 0
  %v1419 = vsel %vm371, %v1357, 0
  %1421 = vmatprep.subr.bf16.mxu0 0
  %1422 = vmatpush1.bf16.msra.mxu0 0
  %1423 = vmatprep.subr.bf16.mxu0 0
  %1424 = vmatpush1.bf16.msra.mxu0 0
  %1425 = vmatprep.subr.bf16.mxu0 0
  %1426 = vmatpush1.bf16.msra.mxu0 0
  %1427 = vmatprep.subr.bf16.mxu0 0
  %1428 = vmatpush1.bf16.msra.mxu0 0
  %1429 = vmatprep.subr.bf16.mxu0 0
  %1430 = vmatpush1.bf16.msra.mxu0 %v1392
  %1431 = vmatprep.subr.bf16.mxu0 0
  %1432 = vmatpush1.bf16.msra.mxu0 %v1391
  %1433 = vmatprep.subr.bf16.mxu0 0
  %1434 = vmatpush1.bf16.msra.mxu0 %v1390
  %1435 = vmatprep.subr.bf16.mxu0 0
  %1436 = vmatpush1.bf16.msra.mxu0 %v1389
  %1437 = vmatprep.subr.bf16.mxu0 0
  %1438 = vmatpush2.bf16.msra.mxu0 0
  %1439 = vmatprep.subr.bf16.mxu0 0
  %1440 = vmatpush2.bf16.msra.mxu0 0
  %1441 = vmatprep.subr.bf16.mxu0 0
  %1442 = vmatpush2.bf16.msra.mxu0 0
  %1443 = vmatprep.subr.bf16.mxu0 0
  %1444 = vmatpush2.bf16.msra.mxu0 0
  %1445 = vmatprep.subr.bf16.mxu0 0
  %1446 = vmatpush2.bf16.msra.mxu0 0
  %1447 = vmatprep.subr.bf16.mxu0 0
  %1448 = vmatpush2.bf16.msra.mxu0 0
  %1449 = vmatprep.subr.bf16.mxu0 0
  %1450 = vmatpush2.bf16.msra.mxu0 0
  %1451 = vmatprep.subr.bf16.mxu0 0
  %1452 = vmatpush2.bf16.msra.mxu0 0
  %1453 = vmatprep.mubr.bf16.mxu0 0
  %1454 = vmatmul.mubr.bf16.gmra.mxu0 %v1398
  %v1455 = vpop.f32.mrf.mxu0
  %v1456 = vadd.f32 %v1371, %v1455
  %v1457 = vpop.f32.mrf.mxu0
  %v1458 = vpop.f32.mrf.mxu0
  %v1459 = vadd.f32 %v1371, %v1458
  %v1460 = vpop.f32.mrf.mxu0
  %1461 = vmatprep.mubr.bf16.mxu0 0
  %1462 = vmatmul.mubr.bf16.gmra.mxu0 %v1401
  %v1463 = vpop.f32.mrf.mxu0
  %v1464 = vadd.f32 %v1371, %v1463
  %v1465 = vpop.f32.mrf.mxu0
  %v1466 = vpop.f32.mrf.mxu0
  %v1467 = vadd.f32 %v1371, %v1466
  %v1468 = vpop.f32.mrf.mxu0
  %1469 = vmatprep.mubr.bf16.mxu0 0
  %1470 = vmatmul.mubr.bf16.gmra.mxu0 %v1404
  %v1471 = vpop.f32.mrf.mxu0
  %v1472 = vadd.f32 %v1371, %v1471
  %v1473 = vpop.f32.mrf.mxu0
  %v1474 = vpop.f32.mrf.mxu0
  %v1475 = vadd.f32 %v1371, %v1474
  %v1476 = vpop.f32.mrf.mxu0
  %1477 = vmatprep.mubr.bf16.mxu0 0
  %1478 = vmatmul.mubr.bf16.gmra.mxu0 %v1407
  %v1479 = vpop.f32.mrf.mxu0
  %v1480 = vadd.f32 %v1371, %v1479
  %v1481 = vpop.f32.mrf.mxu0
  %v1482 = vpop.f32.mrf.mxu0
  %v1483 = vadd.f32 %v1371, %v1482
  %v1484 = vpop.f32.mrf.mxu0
  %1485 = vmatprep.mubr.bf16.mxu0 0
  %1486 = vmatmul.mubr.bf16.gmra.mxu0 %v1410
  %v1487 = vpop.f32.mrf.mxu0
  %v1488 = vadd.f32 %v1371, %v1487
  %v1489 = vpop.f32.mrf.mxu0
  %v1490 = vpop.f32.mrf.mxu0
  %v1491 = vadd.f32 %v1371, %v1490
  %v1492 = vpop.f32.mrf.mxu0
  %1493 = vmatprep.mubr.bf16.mxu0 0
  %1494 = vmatmul.mubr.bf16.gmra.mxu0 %v1413
  %v1495 = vpop.f32.mrf.mxu0
  %v1496 = vadd.f32 %v1371, %v1495
  %v1497 = vpop.f32.mrf.mxu0
  %v1498 = vpop.f32.mrf.mxu0
  %v1499 = vadd.f32 %v1371, %v1498
  %v1500 = vpop.f32.mrf.mxu0
  %1501 = vmatprep.mubr.bf16.mxu0 0
  %1502 = vmatmul.mubr.bf16.gmra.mxu0 %v1416
  %v1503 = vpop.f32.mrf.mxu0
  %v1504 = vadd.f32 %v1371, %v1503
  %v1505 = vpop.f32.mrf.mxu0
  %v1506 = vpop.f32.mrf.mxu0
  %v1507 = vadd.f32 %v1371, %v1506
  %v1508 = vpop.f32.mrf.mxu0
  %1509 = vmatprep.mubr.bf16.mxu0 0
  %1510 = vmatmul.mubr.bf16.gmra.mxu0 %v1419
  %v1511 = vpop.f32.mrf.mxu0
  %v1512 = vadd.f32 %v1371, %v1511
  %v1513 = vpop.f32.mrf.mxu0
  %v1514 = vpop.f32.mrf.mxu0
  %v1515 = vadd.f32 %v1371, %v1514
  %v1516 = vpop.f32.mrf.mxu0
  %1517 = vdwg.mxu0
  %v1518 = vpack.c.bf16 %v1459, %v1456
  %v1519 = vpack.c.bf16 %v1467, %v1464
  %v1520 = vpack.c.bf16 %v1475, %v1472
  %v1521 = vpack.c.bf16 %v1483, %v1480
  %v1522 = vpack.c.bf16 %v1491, %v1488
  %v1523 = vpack.c.bf16 %v1499, %v1496
  %v1524 = vpack.c.bf16 %v1507, %v1504
  %v1525 = vpack.c.bf16 %v1515, %v1512
  %v1534 = vunpack.c.l.b16 %v1518
  %v1535 = vunpack.c.h.b16 %v1518
  %v1536 = vunpack.c.l.b16 %v1519
  %v1537 = vunpack.c.h.b16 %v1519
  %v1538 = vunpack.c.l.b16 %v1520
  %v1539 = vunpack.c.h.b16 %v1520
  %v1540 = vunpack.c.l.b16 %v1521
  %v1541 = vunpack.c.h.b16 %v1521
  %v1542 = vunpack.c.l.b16 %v1522
  %v1543 = vunpack.c.h.b16 %v1522
  %v1544 = vunpack.c.l.b16 %v1523
  %v1545 = vunpack.c.h.b16 %v1523
  %v1546 = vunpack.c.l.b16 %v1524
  %v1547 = vunpack.c.h.b16 %v1524
  %v1548 = vunpack.c.l.b16 %v1525
  %v1549 = vunpack.c.h.b16 %v1525
  %v1550 = vpack.c.b16 %v1534, %v1534
  %v1551 = vpack.c.b16 %v1535, %v1535
  %v1552 = vpack.c.b16 %v1536, %v1536
  %v1553 = vpack.c.b16 %v1537, %v1537
  %v1554 = vpack.c.b16 %v1538, %v1538
  %v1555 = vpack.c.b16 %v1539, %v1539
  %v1556 = vpack.c.b16 %v1540, %v1540
  %v1557 = vpack.c.b16 %v1541, %v1541
  %v1558 = vpack.c.b16 %v1542, %v1542
  %v1559 = vpack.c.b16 %v1543, %v1543
  %v1560 = vpack.c.b16 %v1544, %v1544
  %v1561 = vpack.c.b16 %v1545, %v1545
  %v1562 = vpack.c.b16 %v1546, %v1546
  %v1563 = vpack.c.b16 %v1547, %v1547
  %v1564 = vpack.c.b16 %v1548, %v1548
  %v1565 = vpack.c.b16 %v1549, %v1549
  %1582 = vst [vmem:[%s12] sm:$0xf] %v1550
  %1583 = vst [vmem:[%s12 + $0x4] sm:$0xf] %v1551
  %1584 = vst [vmem:[%s12 + $0x8] sm:$0xf] %v1552
  %1585 = vst [vmem:[%s12 + $0xc] sm:$0xf] %v1553
  %1586 = vst [vmem:[%s12 + $0x10] sm:$0xf] %v1554
  %1587 = vst [vmem:[%s12 + $0x14] sm:$0xf] %v1555
  %1588 = vst [vmem:[%s12 + $0x18] sm:$0xf] %v1556
  %1589 = vst [vmem:[%s12 + $0x1c] sm:$0xf] %v1557
  %1590 = vst [vmem:[%s12 + $0x20] sm:$0xf] %v1558
  %1591 = vst [vmem:[%s12 + $0x24] sm:$0xf] %v1559
  %1592 = vst [vmem:[%s12 + $0x28] sm:$0xf] %v1560
  %1593 = vst [vmem:[%s12 + $0x2c] sm:$0xf] %v1561
  %1594 = vst [vmem:[%s12 + $0x30] sm:$0xf] %v1562
  %1595 = vst [vmem:[%s12 + $0x34] sm:$0xf] %v1563
  %1596 = vst [vmem:[%s12 + $0x38] sm:$0xf] %v1564
  %1597 = vst [vmem:[%s12 + $0x3c] sm:$0xf] %v1565
  // Predicated region
  $region50: #{fused_predictor.1} parent=0 // pred_check
    _
  $region51: #{fused_predictor.1} parent=0 // pred_check_branch
    %1599 = sbr.rel (0) target = $region53
  $region52: #{fused_predictor.1} parent=0 // pred_region
    _
  $region53: #{fused_predictor.1} parent=0 // pred_fallthru
    _
  // Predicated region
  $region54: #{fused_predictor.1} parent=0 // pred_check
    _
  $region55: #{fused_predictor.1} parent=0 // pred_check_branch
    %1601 = sbr.rel (0) target = $region57
  $region56: #{fused_predictor.1} parent=0 // pred_region
    _
  $region57: #{fused_predictor.1} parent=0 // pred_fallthru
    _

</llo_original>
